<compile_context>
chip_gen: v5e
topology: v5e:2x2
jax: 0.10.0
libtpu: 0.0.40
codegen_flags: <defaults>
</compile_context>

<pallas_src>
import math

import jax
import jax.numpy as jnp
import numpy as np
from jax.experimental import pallas as pl
from jax.experimental.pallas import tpu as pltpu

# ----- small, module-consistent config -----
B = 2          # batch
S = 8          # sequence length (<= max_seq_len)
D = 128        # d_embed (small stand-in for 512; must be divisible by h)
H = 8          # heads   (gene[1] == 1 -> 8 heads)
DK = D // H    # d_k
FF = 512       # FFN hidden (gene[2] == 0 -> 512, hard-coded in the module)
LN_EPS = 1e-5  # PyTorch nn.LayerNorm default


def encoder_block_kernel(
    x_ref,                    # (1, S, D)   f32
    ln1_g_ref, ln1_b_ref,     # (1, D)      f32
    wqkv_ref, bqkv_ref,       # (D, 3D) bf16, (1, 3D) f32   (Q part pre-scaled)
    wo_ref, bo_ref,           # (H, DK, D) bf16, (1, D) f32
    ln2_g_ref, ln2_b_ref,     # (1, D)      f32
    w1_ref, b1_ref,           # (D, FF) bf16, (1, FF) f32
    w2_ref, b2_ref,           # (FF, D) bf16, (1, D) f32
    o_ref,                    # (1, S, D)   f32
):
    bf16 = jnp.bfloat16
    x = x_ref[0].astype(jnp.float32)             # (S, D)

    def layernorm(v, g_ref, b_ref):
        mu = jnp.mean(v, axis=-1, keepdims=True)
        c = v - mu
        var = jnp.mean(c * c, axis=-1, keepdims=True)
        inv = jax.lax.rsqrt(var + LN_EPS)
        return c * inv * g_ref[...] + b_ref[...]

    # ---- residual1: x + MHA(LN1(x)) ----------------------------------------
    xn = layernorm(x, ln1_g_ref, ln1_b_ref)      # (S, D) f32

    # Single fused QKV projection (bf16 operands, f32 accumulation).
    # The 1/sqrt(d_k) scale is already folded into the Q columns host-side.
    qkv = jnp.dot(xn.astype(bf16), wqkv_ref[...],
                  preferred_element_type=jnp.float32) + bqkv_ref[...]   # (S, 3D)
    q = qkv[:, :D]                               # 128-aligned slices -> free
    k = qkv[:, D:2 * D]
    v = qkv[:, 2 * D:]

    # Head-batched layout (H, S, DK) via a cheap leading-axis stack.
    def to_heads(t):
        return jnp.stack([t[:, h * DK:(h + 1) * DK] for h in range(H)], axis=0)

    q3 = to_heads(q)                             # (H, S, DK) f32 (pre-scaled)
    k3 = to_heads(k)
    v3 = to_heads(v)

    # mask=None in this forward; TODO(synk): plumb an attention mask if needed.
    s = jnp.einsum("hqd,hkd->hqk", q3, k3,
                   preferred_element_type=jnp.float32)                  # (H, S, S)
    s = s - jnp.max(s, axis=-1, keepdims=True)
    e = jnp.exp(s)
    p = e * pl.reciprocal(jnp.sum(e, axis=-1, keepdims=True), approx=True)
    ctx = jnp.einsum("hqk,hkd->hqd", p, v3,
                     preferred_element_type=jnp.float32)                # (H, S, DK)

    # Output projection folded per head: sum_h ctx_h @ Wo_h   (Wo host-reshaped
    # to (H, DK, D)); leading-axis sum is plain VALU adds, no lane concat.
    proj = jnp.einsum("hsd,hdo->hso", ctx.astype(bf16), wo_ref[...],
                      preferred_element_type=jnp.float32)               # (H, S, D)
    attn = jnp.sum(proj, axis=0) + bo_ref[...]                          # (S, D)

    x1 = x + attn                                # dropout = identity (eval)

    # ---- residual2: x1 + FFN(LN2(x1)) ---------------------------------------
    xn2 = layernorm(x1, ln2_g_ref, ln2_b_ref)
    hdn = jnp.dot(xn2.astype(bf16), w1_ref[...],
                  preferred_element_type=jnp.float32) + b1_ref[...]
    hdn = jnp.maximum(hdn, 0.0)
    ffn = jnp.dot(hdn.astype(bf16), w2_ref[...],
                  preferred_element_type=jnp.float32) + b2_ref[...]

    o_ref[0] = (x1 + ffn).astype(o_ref.dtype)


def encoder_block_ga(x, kp):
    """x: (B, S, D) f32.  kp: packed kernel params (see pack_params)."""
    full = lambda shape: pl.BlockSpec(shape, lambda b: (0,) * len(shape))
    in_specs = [
        pl.BlockSpec((1, S, D), lambda b: (b, 0, 0)),     # x
        full((1, D)), full((1, D)),                       # ln1 gamma/beta
        full((D, 3 * D)), full((1, 3 * D)),               # Wqkv (bf16), bqkv
        full((H, DK, D)), full((1, D)),                   # Wo per-head (bf16), bo
        full((1, D)), full((1, D)),                       # ln2 gamma/beta
        full((D, FF)), full((1, FF)),                     # W1 (bf16), b1
        full((FF, D)), full((1, D)),                      # W2 (bf16), b2
    ]
    return pl.pallas_call(
        encoder_block_kernel,
        out_shape=jax.ShapeDtypeStruct((B, S, D), jnp.float32),
        grid_spec=pltpu.PrefetchScalarGridSpec(
            num_scalar_prefetch=0,
            grid=(B,),
            in_specs=in_specs,
            out_specs=pl.BlockSpec((1, S, D), lambda b: (b, 0, 0)),
        ),
        compiler_params=pltpu.CompilerParams(
            # "parallel" lets the two v7x TensorCores take one batch each;
            # on single-TC v5e/v6e the second grid step is ~0.35 us overhead.
            dimension_semantics=("parallel",),
        ),
    )(
        x,
        kp["ln1_g"], kp["ln1_b"],
        kp["wqkv"], kp["bqkv"],
        kp["wo_h"], kp["bo"],
        kp["ln2_g"], kp["ln2_b"],
        kp["w1"], kp["b1"],
        kp["w2"], kp["b2"],
    )


def init_params(key):
    """Deterministic init mimicking PyTorch Linear default (U[-1/sqrt(fan_in), +])."""
    def linear(key, fan_in, fan_out):
        kw, kb = jax.random.split(key)
        lim = 1.0 / math.sqrt(fan_in)
        w = jax.random.uniform(kw, (fan_in, fan_out), jnp.float32, -lim, lim)
        b = jax.random.uniform(kb, (1, fan_out), jnp.float32, -lim, lim)
        return w, b

    keys = jax.random.split(key, 6)
    wq, bq = linear(keys[0], D, D)
    wk, bk = linear(keys[1], D, D)
    wv, bv = linear(keys[2], D, D)
    wo, bo = linear(keys[3], D, D)
    w1, b1 = linear(keys[4], D, FF)
    w2, b2 = linear(keys[5], FF, D)
    return dict(
        ln1_g=jnp.ones((1, D), jnp.float32), ln1_b=jnp.zeros((1, D), jnp.float32),
        ln2_g=jnp.ones((1, D), jnp.float32), ln2_b=jnp.zeros((1, D), jnp.float32),
        wq=wq, bq=bq, wk=wk, bk=bk, wv=wv, bv=bv, wo=wo, bo=bo,
        w1=w1, b1=b1, w2=w2, b2=b2,
    )


def pack_params(p):
    """Host-side packing:
       * fuse QKV into one (D, 3D) weight / (1, 3D) bias,
       * fold the 1/sqrt(d_k) attention scale (exactly 0.25 here -> bit-exact)
         into the Q columns so the kernel never multiplies scores by the scale,
       * reshape Wo per head to (H, DK, D),
       * cast all matmul weights to bf16 (biases / LN params stay f32)."""
    bf = jnp.bfloat16
    scale = 1.0 / math.sqrt(DK)                  # 0.25 -> exact power of two
    return dict(
        ln1_g=p["ln1_g"], ln1_b=p["ln1_b"],
        ln2_g=p["ln2_g"], ln2_b=p["ln2_b"],
        wqkv=jnp.concatenate([p["wq"] * scale, p["wk"], p["wv"]], axis=1).astype(bf),
        bqkv=jnp.concatenate([p["bq"] * scale, p["bk"], p["bv"]], axis=1),
        wo_h=p["wo"].reshape(H, DK, D).astype(bf),   # Wo[h*DK+d, o] -> [h, d, o]
        bo=p["bo"],
        w1=p["w1"].astype(bf), b1=p["b1"],
        w2=p["w2"].astype(bf), b2=p["b2"],
    )


def reference(x, p):
    """Pure-JAX reference of the same forward (eval mode), emulating the
    kernel's mixed precision (bf16 matmul operands, f32 accumulation)."""
    bf = jnp.bfloat16

    def ln(v, g, b):
        mu = jnp.mean(v, -1, keepdims=True)
        var = jnp.mean((v - mu) ** 2, -1, keepdims=True)
        return (v - mu) * jax.lax.rsqrt(var + LN_EPS) * g + b

    def mm(a, w):
        return jnp.dot(a.astype(bf), w.astype(bf),
                       preferred_element_type=jnp.float32)

    xn = ln(x, p["ln1_g"], p["ln1_b"])
    q = mm(xn, p["wq"]) + p["bq"]
    k = mm(xn, p["wk"]) + p["bk"]
    v = mm(xn, p["wv"]) + p["bv"]
    q = q.reshape(B, S, H, DK).transpose(0, 2, 1, 3)
    k = k.reshape(B, S, H, DK).transpose(0, 2, 1, 3)
    v = v.reshape(B, S, H, DK).transpose(0, 2, 1, 3)
    s = jnp.einsum("bhqd,bhkd->bhqk", q, k) / math.sqrt(DK)
    pattn = jax.nn.softmax(s, axis=-1)
    a = jnp.einsum("bhqk,bhkd->bhqd", pattn, v).transpose(0, 2, 1, 3).reshape(B, S, D)
    x1 = x + (mm(a, p["wo"]) + p["bo"])
    xn2 = ln(x1, p["ln2_g"], p["ln2_b"])
    ffn = mm(jnp.maximum(mm(xn2, p["w1"]) + p["b1"], 0.0), p["w2"]) + p["b2"]
    return x1 + ffn


if __name__ == "__main__":
    key = jax.random.PRNGKey(0)
    kx, kp = jax.random.split(key)
    x = jax.random.normal(kx, (B, S, D), jnp.float32)
    params = init_params(kp)
    kparams = pack_params(params)

    out = jax.block_until_ready(encoder_block_ga(x, kparams))
    ref = jax.block_until_ready(reference(x, params))

    # bf16 weights/operands + approx-reciprocal softmax -> looser tolerance.
    np.testing.assert_allclose(np.asarray(out), np.asarray(ref), rtol=1e-2, atol=1e-2)

    print("KERNEL_OK")
</pallas_src>

<mosaic_0001>
module attributes {stable_mosaic.version = 11 : i64} {
  func.func @encoder_block_kernel(%arg0: i32, %arg1: memref<1x8x128xf32, #tpu.memory_space<vmem>>, %arg2: memref<1x128xf32, #tpu.memory_space<vmem>>, %arg3: memref<1x128xf32, #tpu.memory_space<vmem>>, %arg4: memref<128x384xbf16, #tpu.memory_space<vmem>>, %arg5: memref<1x384xf32, #tpu.memory_space<vmem>>, %arg6: memref<8x16x128xbf16, #tpu.memory_space<vmem>>, %arg7: memref<1x128xf32, #tpu.memory_space<vmem>>, %arg8: memref<1x128xf32, #tpu.memory_space<vmem>>, %arg9: memref<1x128xf32, #tpu.memory_space<vmem>>, %arg10: memref<128x512xbf16, #tpu.memory_space<vmem>>, %arg11: memref<1x512xf32, #tpu.memory_space<vmem>>, %arg12: memref<512x128xbf16, #tpu.memory_space<vmem>>, %arg13: memref<1x128xf32, #tpu.memory_space<vmem>>, %arg14: memref<1x8x128xf32, #tpu.memory_space<vmem>>) attributes {dimension_semantics = [#tpu.dimension_semantics<parallel>], iteration_bounds = array<i64: 2>, scalar_prefetch = 0 : i64, scratch_operands = 0 : i64, tpu.core_type = #tpu.core_type<tc>, window_params = [{transform_indices = @transform_0, window_bounds = array<i64: 1, 8, 128>}, {pipeline_mode = #tpu.pipeline_mode<synchronous>, transform_indices = @transform_1, window_bounds = array<i64: 1, 128>}, {pipeline_mode = #tpu.pipeline_mode<synchronous>, transform_indices = @transform_2, window_bounds = array<i64: 1, 128>}, {pipeline_mode = #tpu.pipeline_mode<synchronous>, transform_indices = @transform_3, window_bounds = array<i64: 128, 384>}, {pipeline_mode = #tpu.pipeline_mode<synchronous>, transform_indices = @transform_4, window_bounds = array<i64: 1, 384>}, {pipeline_mode = #tpu.pipeline_mode<synchronous>, transform_indices = @transform_5, window_bounds = array<i64: 8, 16, 128>}, {pipeline_mode = #tpu.pipeline_mode<synchronous>, transform_indices = @transform_6, window_bounds = array<i64: 1, 128>}, {pipeline_mode = #tpu.pipeline_mode<synchronous>, transform_indices = @transform_7, window_bounds = array<i64: 1, 128>}, {pipeline_mode = #tpu.pipeline_mode<synchronous>, transform_indices = @transform_8, window_bounds = array<i64: 1, 128>}, {pipeline_mode = #tpu.pipeline_mode<synchronous>, transform_indices = @transform_9, window_bounds = array<i64: 128, 512>}, {pipeline_mode = #tpu.pipeline_mode<synchronous>, transform_indices = @transform_10, window_bounds = array<i64: 1, 512>}, {pipeline_mode = #tpu.pipeline_mode<synchronous>, transform_indices = @transform_11, window_bounds = array<i64: 512, 128>}, {pipeline_mode = #tpu.pipeline_mode<synchronous>, transform_indices = @transform_12, window_bounds = array<i64: 1, 128>}, {transform_indices = @transform_13, window_bounds = array<i64: 1, 8, 128>}]} {
    %c0 = arith.constant 0 : index
    %c0_0 = arith.constant 0 : index
    %c0_1 = arith.constant 0 : index
    %0 = vector.load %arg1[%c0, %c0_0, %c0_1] : memref<1x8x128xf32, #tpu.memory_space<vmem>>, vector<1x8x128xf32>
    %1 = vector.shape_cast %0 : vector<1x8x128xf32> to vector<8x128xf32>
    %cst = arith.constant dense<0.000000e+00> : vector<8xf32>
    %2 = vector.multi_reduction <add>, %1, %cst [1] : vector<8x128xf32> to vector<8xf32>
    %3 = vector.shape_cast %2 : vector<8xf32> to vector<8x1xf32>
    %cst_2 = arith.constant 1.280000e+02 : f32
    %4 = vector.broadcast %cst_2 : f32 to vector<8x1xf32>
    %5 = arith.divf %3, %4 : vector<8x1xf32>
    %6 = vector.broadcast %5 : vector<8x1xf32> to vector<8x128xf32>
    %7 = arith.subf %1, %6 : vector<8x128xf32>
    %8 = arith.mulf %7, %7 : vector<8x128xf32>
    %cst_3 = arith.constant dense<0.000000e+00> : vector<8xf32>
    %9 = vector.multi_reduction <add>, %8, %cst_3 [1] : vector<8x128xf32> to vector<8xf32>
    %10 = vector.shape_cast %9 : vector<8xf32> to vector<8x1xf32>
    %cst_4 = arith.constant 1.280000e+02 : f32
    %11 = vector.broadcast %cst_4 : f32 to vector<8x1xf32>
    %12 = arith.divf %10, %11 : vector<8x1xf32>
    %cst_5 = arith.constant 9.99999974E-6 : f32
    %13 = vector.broadcast %cst_5 : f32 to vector<8x1xf32>
    %14 = arith.addf %12, %13 : vector<8x1xf32>
    %15 = math.rsqrt %14 : vector<8x1xf32>
    %16 = vector.broadcast %15 : vector<8x1xf32> to vector<8x128xf32>
    %17 = arith.mulf %7, %16 : vector<8x128xf32>
    %c0_6 = arith.constant 0 : index
    %c0_7 = arith.constant 0 : index
    %18 = vector.load %arg2[%c0_6, %c0_7] : memref<1x128xf32, #tpu.memory_space<vmem>>, vector<1x128xf32>
    %19 = vector.broadcast %18 : vector<1x128xf32> to vector<8x128xf32>
    %20 = arith.mulf %17, %19 : vector<8x128xf32>
    %c0_8 = arith.constant 0 : index
    %c0_9 = arith.constant 0 : index
    %21 = vector.load %arg3[%c0_8, %c0_9] : memref<1x128xf32, #tpu.memory_space<vmem>>, vector<1x128xf32>
    %22 = vector.broadcast %21 : vector<1x128xf32> to vector<8x128xf32>
    %23 = arith.addf %20, %22 : vector<8x128xf32>
    %24 = arith.truncf %23 : vector<8x128xf32> to vector<8x128xbf16>
    %c0_10 = arith.constant 0 : index
    %c0_11 = arith.constant 0 : index
    %25 = vector.load %arg4[%c0_10, %c0_11] : memref<128x384xbf16, #tpu.memory_space<vmem>>, vector<128x384xbf16>
    %cst_12 = arith.constant dense<0.000000e+00> : vector<8x384xf32>
    %26 = tpu.matmul %24, %25, %cst_12 {dimension_numbers = #tpu.dot_dimension_numbers<[1], [0], [0], [1], [0, 0, 1, 1], [], []>} : vector<8x128xbf16>, vector<128x384xbf16>, vector<8x384xf32> -> vector<8x384xf32>
    %c0_13 = arith.constant 0 : index
    %c0_14 = arith.constant 0 : index
    %27 = vector.load %arg5[%c0_13, %c0_14] : memref<1x384xf32, #tpu.memory_space<vmem>>, vector<1x384xf32>
    %28 = vector.broadcast %27 : vector<1x384xf32> to vector<8x384xf32>
    %29 = arith.addf %26, %28 : vector<8x384xf32>
    %30 = vector.extract_strided_slice %29 {offsets = [0, 0], sizes = [8, 128], strides = [1, 1]} : vector<8x384xf32> to vector<8x128xf32>
    %31 = vector.extract_strided_slice %29 {offsets = [0, 128], sizes = [8, 128], strides = [1, 1]} : vector<8x384xf32> to vector<8x128xf32>
    %32 = vector.extract_strided_slice %29 {offsets = [0, 256], sizes = [8, 128], strides = [1, 1]} : vector<8x384xf32> to vector<8x128xf32>
    %33 = vector.extract_strided_slice %30 {offsets = [0, 0], sizes = [8, 16], strides = [1, 1]} : vector<8x128xf32> to vector<8x16xf32>
    %34 = vector.extract_strided_slice %30 {offsets = [0, 16], sizes = [8, 16], strides = [1, 1]} : vector<8x128xf32> to vector<8x16xf32>
    %35 = vector.extract_strided_slice %30 {offsets = [0, 32], sizes = [8, 16], strides = [1, 1]} : vector<8x128xf32> to vector<8x16xf32>
    %36 = vector.extract_strided_slice %30 {offsets = [0, 48], sizes = [8, 16], strides = [1, 1]} : vector<8x128xf32> to vector<8x16xf32>
    %37 = vector.extract_strided_slice %30 {offsets = [0, 64], sizes = [8, 16], strides = [1, 1]} : vector<8x128xf32> to vector<8x16xf32>
    %38 = vector.extract_strided_slice %30 {offsets = [0, 80], sizes = [8, 16], strides = [1, 1]} : vector<8x128xf32> to vector<8x16xf32>
    %39 = vector.extract_strided_slice %30 {offsets = [0, 96], sizes = [8, 16], strides = [1, 1]} : vector<8x128xf32> to vector<8x16xf32>
    %40 = vector.extract_strided_slice %30 {offsets = [0, 112], sizes = [8, 16], strides = [1, 1]} : vector<8x128xf32> to vector<8x16xf32>
    %41 = vector.shape_cast %33 : vector<8x16xf32> to vector<1x8x16xf32>
    %42 = vector.shape_cast %34 : vector<8x16xf32> to vector<1x8x16xf32>
    %43 = vector.shape_cast %35 : vector<8x16xf32> to vector<1x8x16xf32>
    %44 = vector.shape_cast %36 : vector<8x16xf32> to vector<1x8x16xf32>
    %45 = vector.shape_cast %37 : vector<8x16xf32> to vector<1x8x16xf32>
    %46 = vector.shape_cast %38 : vector<8x16xf32> to vector<1x8x16xf32>
    %47 = vector.shape_cast %39 : vector<8x16xf32> to vector<1x8x16xf32>
    %48 = vector.shape_cast %40 : vector<8x16xf32> to vector<1x8x16xf32>
    %49 = tpu.concatenate %41, %42, %43, %44, %45, %46, %47, %48 in 0 : vector<1x8x16xf32>, vector<1x8x16xf32>, vector<1x8x16xf32>, vector<1x8x16xf32>, vector<1x8x16xf32>, vector<1x8x16xf32>, vector<1x8x16xf32>, vector<1x8x16xf32> -> vector<8x8x16xf32>
    %50 = vector.extract_strided_slice %31 {offsets = [0, 0], sizes = [8, 16], strides = [1, 1]} : vector<8x128xf32> to vector<8x16xf32>
    %51 = vector.extract_strided_slice %31 {offsets = [0, 16], sizes = [8, 16], strides = [1, 1]} : vector<8x128xf32> to vector<8x16xf32>
    %52 = vector.extract_strided_slice %31 {offsets = [0, 32], sizes = [8, 16], strides = [1, 1]} : vector<8x128xf32> to vector<8x16xf32>
    %53 = vector.extract_strided_slice %31 {offsets = [0, 48], sizes = [8, 16], strides = [1, 1]} : vector<8x128xf32> to vector<8x16xf32>
    %54 = vector.extract_strided_slice %31 {offsets = [0, 64], sizes = [8, 16], strides = [1, 1]} : vector<8x128xf32> to vector<8x16xf32>
    %55 = vector.extract_strided_slice %31 {offsets = [0, 80], sizes = [8, 16], strides = [1, 1]} : vector<8x128xf32> to vector<8x16xf32>
    %56 = vector.extract_strided_slice %31 {offsets = [0, 96], sizes = [8, 16], strides = [1, 1]} : vector<8x128xf32> to vector<8x16xf32>
    %57 = vector.extract_strided_slice %31 {offsets = [0, 112], sizes = [8, 16], strides = [1, 1]} : vector<8x128xf32> to vector<8x16xf32>
    %58 = vector.shape_cast %50 : vector<8x16xf32> to vector<1x8x16xf32>
    %59 = vector.shape_cast %51 : vector<8x16xf32> to vector<1x8x16xf32>
    %60 = vector.shape_cast %52 : vector<8x16xf32> to vector<1x8x16xf32>
    %61 = vector.shape_cast %53 : vector<8x16xf32> to vector<1x8x16xf32>
    %62 = vector.shape_cast %54 : vector<8x16xf32> to vector<1x8x16xf32>
    %63 = vector.shape_cast %55 : vector<8x16xf32> to vector<1x8x16xf32>
    %64 = vector.shape_cast %56 : vector<8x16xf32> to vector<1x8x16xf32>
    %65 = vector.shape_cast %57 : vector<8x16xf32> to vector<1x8x16xf32>
    %66 = tpu.concatenate %58, %59, %60, %61, %62, %63, %64, %65 in 0 : vector<1x8x16xf32>, vector<1x8x16xf32>, vector<1x8x16xf32>, vector<1x8x16xf32>, vector<1x8x16xf32>, vector<1x8x16xf32>, vector<1x8x16xf32>, vector<1x8x16xf32> -> vector<8x8x16xf32>
    %67 = vector.extract_strided_slice %32 {offsets = [0, 0], sizes = [8, 16], strides = [1, 1]} : vector<8x128xf32> to vector<8x16xf32>
    %68 = vector.extract_strided_slice %32 {offsets = [0, 16], sizes = [8, 16], strides = [1, 1]} : vector<8x128xf32> to vector<8x16xf32>
    %69 = vector.extract_strided_slice %32 {offsets = [0, 32], sizes = [8, 16], strides = [1, 1]} : vector<8x128xf32> to vector<8x16xf32>
    %70 = vector.extract_strided_slice %32 {offsets = [0, 48], sizes = [8, 16], strides = [1, 1]} : vector<8x128xf32> to vector<8x16xf32>
    %71 = vector.extract_strided_slice %32 {offsets = [0, 64], sizes = [8, 16], strides = [1, 1]} : vector<8x128xf32> to vector<8x16xf32>
    %72 = vector.extract_strided_slice %32 {offsets = [0, 80], sizes = [8, 16], strides = [1, 1]} : vector<8x128xf32> to vector<8x16xf32>
    %73 = vector.extract_strided_slice %32 {offsets = [0, 96], sizes = [8, 16], strides = [1, 1]} : vector<8x128xf32> to vector<8x16xf32>
    %74 = vector.extract_strided_slice %32 {offsets = [0, 112], sizes = [8, 16], strides = [1, 1]} : vector<8x128xf32> to vector<8x16xf32>
    %75 = vector.shape_cast %67 : vector<8x16xf32> to vector<1x8x16xf32>
    %76 = vector.shape_cast %68 : vector<8x16xf32> to vector<1x8x16xf32>
    %77 = vector.shape_cast %69 : vector<8x16xf32> to vector<1x8x16xf32>
    %78 = vector.shape_cast %70 : vector<8x16xf32> to vector<1x8x16xf32>
    %79 = vector.shape_cast %71 : vector<8x16xf32> to vector<1x8x16xf32>
    %80 = vector.shape_cast %72 : vector<8x16xf32> to vector<1x8x16xf32>
    %81 = vector.shape_cast %73 : vector<8x16xf32> to vector<1x8x16xf32>
    %82 = vector.shape_cast %74 : vector<8x16xf32> to vector<1x8x16xf32>
    %83 = tpu.concatenate %75, %76, %77, %78, %79, %80, %81, %82 in 0 : vector<1x8x16xf32>, vector<1x8x16xf32>, vector<1x8x16xf32>, vector<1x8x16xf32>, vector<1x8x16xf32>, vector<1x8x16xf32>, vector<1x8x16xf32>, vector<1x8x16xf32> -> vector<8x8x16xf32>
    "tpu.trace_start"() <{level = 10 : i32, message = "hqd,hkd->hqk"}> : () -> ()
    %cst_15 = arith.constant dense<0.000000e+00> : vector<8x8x8xf32>
    %84 = tpu.matmul %49, %66, %cst_15 {dimension_numbers = #tpu.dot_dimension_numbers<[2], [2], [1], [1], [0, 0, 0, 1, 1, 1], [0], [0]>} : vector<8x8x16xf32>, vector<8x8x16xf32>, vector<8x8x8xf32> -> vector<8x8x8xf32>
    "tpu.trace_stop"() : () -> ()
    %cst_16 = arith.constant dense<0xFF800000> : vector<8x8xf32>
    %85 = vector.multi_reduction <maximumf>, %84, %cst_16 [2] : vector<8x8x8xf32> to vector<8x8xf32>
    %86 = vector.shape_cast %85 : vector<8x8xf32> to vector<8x8x1xf32>
    %87 = vector.broadcast %86 : vector<8x8x1xf32> to vector<8x8x8xf32>
    %88 = arith.subf %84, %87 : vector<8x8x8xf32>
    %89 = math.exp %88 : vector<8x8x8xf32>
    %cst_17 = arith.constant dense<0.000000e+00> : vector<8x8xf32>
    %90 = vector.multi_reduction <add>, %89, %cst_17 [2] : vector<8x8x8xf32> to vector<8x8xf32>
    %91 = vector.shape_cast %90 : vector<8x8xf32> to vector<8x8x1xf32>
    %92 = tpu.reciprocal %91 {approx = true} : vector<8x8x1xf32> -> vector<8x8x1xf32>
    %93 = vector.broadcast %92 : vector<8x8x1xf32> to vector<8x8x8xf32>
    %94 = arith.mulf %89, %93 : vector<8x8x8xf32>
    "tpu.trace_start"() <{level = 10 : i32, message = "hqk,hkd->hqd"}> : () -> ()
    %cst_18 = arith.constant dense<0.000000e+00> : vector<8x8x16xf32>
    %95 = tpu.matmul %94, %83, %cst_18 {dimension_numbers = #tpu.dot_dimension_numbers<[2], [1], [1], [2], [0, 0, 0, 1, 1, 2], [0], [0]>} : vector<8x8x8xf32>, vector<8x8x16xf32>, vector<8x8x16xf32> -> vector<8x8x16xf32>
    "tpu.trace_stop"() : () -> ()
    %96 = arith.truncf %95 : vector<8x8x16xf32> to vector<8x8x16xbf16>
    %c0_19 = arith.constant 0 : index
    %c0_20 = arith.constant 0 : index
    %c0_21 = arith.constant 0 : index
    %97 = vector.load %arg6[%c0_19, %c0_20, %c0_21] : memref<8x16x128xbf16, #tpu.memory_space<vmem>>, vector<8x16x128xbf16>
    "tpu.trace_start"() <{level = 10 : i32, message = "hsd,hdo->hso"}> : () -> ()
    %cst_22 = arith.constant dense<0.000000e+00> : vector<8x8x128xf32>
    %98 = tpu.matmul %96, %97, %cst_22 {dimension_numbers = #tpu.dot_dimension_numbers<[2], [1], [1], [2], [0, 0, 0, 1, 1, 2], [0], [0]>} : vector<8x8x16xbf16>, vector<8x16x128xbf16>, vector<8x8x128xf32> -> vector<8x8x128xf32>
    "tpu.trace_stop"() : () -> ()
    %cst_23 = arith.constant dense<0.000000e+00> : vector<8x128xf32>
    %99 = vector.multi_reduction <add>, %98, %cst_23 [0] : vector<8x8x128xf32> to vector<8x128xf32>
    %c0_24 = arith.constant 0 : index
    %c0_25 = arith.constant 0 : index
    %100 = vector.load %arg7[%c0_24, %c0_25] : memref<1x128xf32, #tpu.memory_space<vmem>>, vector<1x128xf32>
    %101 = vector.broadcast %100 : vector<1x128xf32> to vector<8x128xf32>
    %102 = arith.addf %99, %101 : vector<8x128xf32>
    %103 = arith.addf %1, %102 : vector<8x128xf32>
    %cst_26 = arith.constant dense<0.000000e+00> : vector<8xf32>
    %104 = vector.multi_reduction <add>, %103, %cst_26 [1] : vector<8x128xf32> to vector<8xf32>
    %105 = vector.shape_cast %104 : vector<8xf32> to vector<8x1xf32>
    %cst_27 = arith.constant 1.280000e+02 : f32
    %106 = vector.broadcast %cst_27 : f32 to vector<8x1xf32>
    %107 = arith.divf %105, %106 : vector<8x1xf32>
    %108 = vector.broadcast %107 : vector<8x1xf32> to vector<8x128xf32>
    %109 = arith.subf %103, %108 : vector<8x128xf32>
    %110 = arith.mulf %109, %109 : vector<8x128xf32>
    %cst_28 = arith.constant dense<0.000000e+00> : vector<8xf32>
    %111 = vector.multi_reduction <add>, %110, %cst_28 [1] : vector<8x128xf32> to vector<8xf32>
    %112 = vector.shape_cast %111 : vector<8xf32> to vector<8x1xf32>
    %cst_29 = arith.constant 1.280000e+02 : f32
    %113 = vector.broadcast %cst_29 : f32 to vector<8x1xf32>
    %114 = arith.divf %112, %113 : vector<8x1xf32>
    %cst_30 = arith.constant 9.99999974E-6 : f32
    %115 = vector.broadcast %cst_30 : f32 to vector<8x1xf32>
    %116 = arith.addf %114, %115 : vector<8x1xf32>
    %117 = math.rsqrt %116 : vector<8x1xf32>
    %118 = vector.broadcast %117 : vector<8x1xf32> to vector<8x128xf32>
    %119 = arith.mulf %109, %118 : vector<8x128xf32>
    %c0_31 = arith.constant 0 : index
    %c0_32 = arith.constant 0 : index
    %120 = vector.load %arg8[%c0_31, %c0_32] : memref<1x128xf32, #tpu.memory_space<vmem>>, vector<1x128xf32>
    %121 = vector.broadcast %120 : vector<1x128xf32> to vector<8x128xf32>
    %122 = arith.mulf %119, %121 : vector<8x128xf32>
    %c0_33 = arith.constant 0 : index
    %c0_34 = arith.constant 0 : index
    %123 = vector.load %arg9[%c0_33, %c0_34] : memref<1x128xf32, #tpu.memory_space<vmem>>, vector<1x128xf32>
    %124 = vector.broadcast %123 : vector<1x128xf32> to vector<8x128xf32>
    %125 = arith.addf %122, %124 : vector<8x128xf32>
    %126 = arith.truncf %125 : vector<8x128xf32> to vector<8x128xbf16>
    %c0_35 = arith.constant 0 : index
    %c0_36 = arith.constant 0 : index
    %127 = vector.load %arg10[%c0_35, %c0_36] : memref<128x512xbf16, #tpu.memory_space<vmem>>, vector<128x512xbf16>
    %cst_37 = arith.constant dense<0.000000e+00> : vector<8x512xf32>
    %128 = tpu.matmul %126, %127, %cst_37 {dimension_numbers = #tpu.dot_dimension_numbers<[1], [0], [0], [1], [0, 0, 1, 1], [], []>} : vector<8x128xbf16>, vector<128x512xbf16>, vector<8x512xf32> -> vector<8x512xf32>
    %c0_38 = arith.constant 0 : index
    %c0_39 = arith.constant 0 : index
    %129 = vector.load %arg11[%c0_38, %c0_39] : memref<1x512xf32, #tpu.memory_space<vmem>>, vector<1x512xf32>
    %130 = vector.broadcast %129 : vector<1x512xf32> to vector<8x512xf32>
    %131 = arith.addf %128, %130 : vector<8x512xf32>
    %cst_40 = arith.constant 0.000000e+00 : f32
    %132 = vector.broadcast %cst_40 : f32 to vector<8x512xf32>
    %133 = arith.maximumf %131, %132 : vector<8x512xf32>
    %134 = arith.truncf %133 : vector<8x512xf32> to vector<8x512xbf16>
    %c0_41 = arith.constant 0 : index
    %c0_42 = arith.constant 0 : index
    %135 = vector.load %arg12[%c0_41, %c0_42] : memref<512x128xbf16, #tpu.memory_space<vmem>>, vector<512x128xbf16>
    %cst_43 = arith.constant dense<0.000000e+00> : vector<8x128xf32>
    %136 = tpu.matmul %134, %135, %cst_43 {dimension_numbers = #tpu.dot_dimension_numbers<[1], [0], [0], [1], [0, 0, 1, 1], [], []>} : vector<8x512xbf16>, vector<512x128xbf16>, vector<8x128xf32> -> vector<8x128xf32>
    %c0_44 = arith.constant 0 : index
    %c0_45 = arith.constant 0 : index
    %137 = vector.load %arg13[%c0_44, %c0_45] : memref<1x128xf32, #tpu.memory_space<vmem>>, vector<1x128xf32>
    %138 = vector.broadcast %137 : vector<1x128xf32> to vector<8x128xf32>
    %139 = arith.addf %136, %138 : vector<8x128xf32>
    %140 = arith.addf %103, %139 : vector<8x128xf32>
    %c0_46 = arith.constant 0 : index
    %c0_47 = arith.constant 0 : index
    %c0_48 = arith.constant 0 : index
    %141 = vector.load %arg14[%c0_46, %c0_47, %c0_48] : memref<1x8x128xf32, #tpu.memory_space<vmem>>, vector<1x8x128xf32>
    %142 = vector.shape_cast %141 : vector<1x8x128xf32> to vector<8x128xf32>
    %143 = vector.shape_cast %140 : vector<8x128xf32> to vector<1x8x128xf32>
    tpu.vector_store %arg14[%c0_46, %c0_47, %c0_48], %143 {strides = array<i32>} : memref<1x8x128xf32, #tpu.memory_space<vmem>>, vector<1x8x128xf32>,
    return
  }
  func.func @transform_0(%arg0: i32) -> (i32, i32, i32) {
    %c0_i32 = arith.constant 0 : i32
    %c0_i32_0 = arith.constant 0 : i32
    %c0_i32_1 = arith.constant 0 : i32
    return %arg0, %c0_i32, %c0_i32_0 : i32, i32, i32
  }
  func.func @transform_1(%arg0: i32) -> (i32, i32) {
    %c0_i32 = arith.constant 0 : i32
    %c0_i32_0 = arith.constant 0 : i32
    %c0_i32_1 = arith.constant 0 : i32
    return %c0_i32, %c0_i32_0 : i32, i32
  }
  func.func @transform_2(%arg0: i32) -> (i32, i32) {
    %c0_i32 = arith.constant 0 : i32
    %c0_i32_0 = arith.constant 0 : i32
    %c0_i32_1 = arith.constant 0 : i32
    return %c0_i32, %c0_i32_0 : i32, i32
  }
  func.func @transform_3(%arg0: i32) -> (i32, i32) {
    %c0_i32 = arith.constant 0 : i32
    %c0_i32_0 = arith.constant 0 : i32
    %c0_i32_1 = arith.constant 0 : i32
    return %c0_i32, %c0_i32_0 : i32, i32
  }
  func.func @transform_4(%arg0: i32) -> (i32, i32) {
    %c0_i32 = arith.constant 0 : i32
    %c0_i32_0 = arith.constant 0 : i32
    %c0_i32_1 = arith.constant 0 : i32
    return %c0_i32, %c0_i32_0 : i32, i32
  }
  func.func @transform_5(%arg0: i32) -> (i32, i32, i32) {
    %c0_i32 = arith.constant 0 : i32
    %c0_i32_0 = arith.constant 0 : i32
    %c0_i32_1 = arith.constant 0 : i32
    %c0_i32_2 = arith.constant 0 : i32
    return %c0_i32, %c0_i32_0, %c0_i32_1 : i32, i32, i32
  }
  func.func @transform_6(%arg0: i32) -> (i32, i32) {
    %c0_i32 = arith.constant 0 : i32
    %c0_i32_0 = arith.constant 0 : i32
    %c0_i32_1 = arith.constant 0 : i32
    return %c0_i32, %c0_i32_0 : i32, i32
  }
  func.func @transform_7(%arg0: i32) -> (i32, i32) {
    %c0_i32 = arith.constant 0 : i32
    %c0_i32_0 = arith.constant 0 : i32
    %c0_i32_1 = arith.constant 0 : i32
    return %c0_i32, %c0_i32_0 : i32, i32
  }
  func.func @transform_8(%arg0: i32) -> (i32, i32) {
    %c0_i32 = arith.constant 0 : i32
    %c0_i32_0 = arith.constant 0 : i32
    %c0_i32_1 = arith.constant 0 : i32
    return %c0_i32, %c0_i32_0 : i32, i32
  }
  func.func @transform_9(%arg0: i32) -> (i32, i32) {
    %c0_i32 = arith.constant 0 : i32
    %c0_i32_0 = arith.constant 0 : i32
    %c0_i32_1 = arith.constant 0 : i32
    return %c0_i32, %c0_i32_0 : i32, i32
  }
  func.func @transform_10(%arg0: i32) -> (i32, i32) {
    %c0_i32 = arith.constant 0 : i32
    %c0_i32_0 = arith.constant 0 : i32
    %c0_i32_1 = arith.constant 0 : i32
    return %c0_i32, %c0_i32_0 : i32, i32
  }
  func.func @transform_11(%arg0: i32) -> (i32, i32) {
    %c0_i32 = arith.constant 0 : i32
    %c0_i32_0 = arith.constant 0 : i32
    %c0_i32_1 = arith.constant 0 : i32
    return %c0_i32, %c0_i32_0 : i32, i32
  }
  func.func @transform_12(%arg0: i32) -> (i32, i32) {
    %c0_i32 = arith.constant 0 : i32
    %c0_i32_0 = arith.constant 0 : i32
    %c0_i32_1 = arith.constant 0 : i32
    return %c0_i32, %c0_i32_0 : i32, i32
  }
  func.func @transform_13(%arg0: i32) -> (i32, i32, i32) {
    %c0_i32 = arith.constant 0 : i32
    %c0_i32_0 = arith.constant 0 : i32
    %c0_i32_1 = arith.constant 0 : i32
    return %arg0, %c0_i32, %c0_i32_0 : i32, i32, i32
  }
}

</mosaic_0001>

<llo_original>
// kernel: tpu_custom_call.1
$region0: #{tpu_custom_call.1}
  #allocation0 [shape = 'u32[]', space=smem, size = 0x4, offset = 0x4, fixed_abs, tag = 'smem constant byte address 0x4 - core index']
  #allocation1 [shape = 'u32[72,128]{1,0:T(1,128)}', space=vmem, size = 0x9000, scoped, tag = 'internal scratch']
  %s0 = inlined_call_operand.hbm [shape: f32[2,8,128], index: 0, kind: input, shape index: {}]
  %s1 = inlined_call_operand.hbm [shape: f32[1,128], index: 1, kind: input, shape index: {}]
  %s2 = inlined_call_operand.hbm [shape: f32[1,128], index: 2, kind: input, shape index: {}]
  %s3 = inlined_call_operand.hbm [shape: bf16[128,384], index: 3, kind: input, shape index: {}]
  %s4 = inlined_call_operand.vmem [shape: f32[1,384], index: 4, kind: input, shape index: {}]
  %s5 = inlined_call_operand.hbm [shape: bf16[8,16,128], index: 5, kind: input, shape index: {}]
  %s6 = inlined_call_operand.hbm [shape: f32[1,128], index: 6, kind: input, shape index: {}]
  %s7 = inlined_call_operand.hbm [shape: f32[1,128], index: 7, kind: input, shape index: {}]
  %s8 = inlined_call_operand.hbm [shape: f32[1,128], index: 8, kind: input, shape index: {}]
  %s9 = inlined_call_operand.hbm [shape: bf16[128,512], index: 9, kind: input, shape index: {}]
  %s10 = inlined_call_operand.vmem [shape: f32[1,512], index: 10, kind: input, shape index: {}]
  %s11 = inlined_call_operand.hbm [shape: bf16[512,128], index: 11, kind: input, shape index: {}]
  %s12 = inlined_call_operand.vmem [shape: f32[1,128], index: 12, kind: input, shape index: {}]
  %s13 = inlined_call_operand.hbm [shape: f32[2,8,128], index: 13, kind: output, shape index: {}]
  %s14 = sld [smem:[#allocation0]]
  $region125: #{tpu_custom_call.1} parent=0
    _
  %s16 = ssub.s32 1, %s14
  %s17 = scalar_select 0, %s16, %s14
  $region1: #{tpu_custom_call.1} parent=0
    #allocation2 [shape = 'u8[8192]{0}', space=vmem, size = 0x2000, scoped, tag = 'input window, operand 0']
    #allocation3 [shape = 's32[2]{0}', space=sflag, size = 0x8, scoped, tag = 'scoped memory for tpu_custom_call.1']
    #allocation4 [shape = 's32[2]{0}', space=sflag, size = 0x8, scoped, tag = 'scoped memory for tpu_custom_call.1']
    #allocation5 [shape = 'u8[512]{0}', space=vmem, size = 0x400, scoped, tag = 'input window, operand 1, single buffered']
    #allocation6 [shape = 's32[1]{0}', space=sflag, size = 0x4, scoped, tag = 'scoped memory for tpu_custom_call.1']
    #allocation7 [shape = 'u8[512]{0}', space=vmem, size = 0x400, scoped, tag = 'input window, operand 2, single buffered']
    #allocation8 [shape = 'u8[98304]{0}', space=vmem, size = 0x18000, scoped, tag = 'input window, operand 3, single buffered']
    #allocation9 [shape = 's32[1]{0}', space=sflag, size = 0x4, scoped, tag = 'scoped memory for tpu_custom_call.1']
    #allocation10 [shape = 'u8[32768]{0}', space=vmem, size = 0x8000, scoped, tag = 'input window, operand 5, single buffered']
    #allocation11 [shape = 'u8[512]{0}', space=vmem, size = 0x400, scoped, tag = 'input window, operand 6, single buffered']
    #allocation12 [shape = 's32[1]{0}', space=sflag, size = 0x4, scoped, tag = 'scoped memory for tpu_custom_call.1']
    #allocation13 [shape = 'u8[512]{0}', space=vmem, size = 0x400, scoped, tag = 'input window, operand 7, single buffered']
    #allocation14 [shape = 'u8[512]{0}', space=vmem, size = 0x400, scoped, tag = 'input window, operand 8, single buffered']
    #allocation15 [shape = 's32[1]{0}', space=sflag, size = 0x4, scoped, tag = 'scoped memory for tpu_custom_call.1']
    #allocation16 [shape = 'u8[131072]{0}', space=vmem, size = 0x20000, scoped, tag = 'input window, operand 9, single buffered']
    #allocation17 [shape = 'u8[131072]{0}', space=vmem, size = 0x20000, scoped, tag = 'input window, operand 11, single buffered']
    #allocation18 [shape = 's32[1]{0}', space=sflag, size = 0x4, scoped, tag = 'scoped memory for tpu_custom_call.1']
    #allocation19 [shape = 'u8[8192]{0}', space=vmem, size = 0x2000, scoped, tag = 'output window, operand 0']
    %18 = vsyncpa [#allocation3], 0
    %s19 = scalar_lea.sflag [#allocation3], 1
    %20 = vsyncpa %s19, 0
    %21 = vsyncpa [#allocation6], 0
    %22 = vsyncpa [#allocation9], 0
    %23 = vsyncpa [#allocation12], 0
    %24 = vsyncpa [#allocation15], 0
    %25 = vsyncpa [#allocation18], 0
    %26 = vsyncpa [#allocation4], 0
    %s27 = scalar_lea.sflag [#allocation4], 1
    %28 = vsyncpa %s27, 0
    loop: start=0, step=1, limit=4
    $region2: #{tpu_custom_call.1} parent=1 // loop_pre_header
      _
    $region3: #{tpu_custom_call.1} parent=1 // loop_header
      %s30 = sphi 0, %s34
      %p31 = scmp.ge.s32.totalorder %s30, 4
      %s40 = sphi 0, %s42
      %s43 = sphi 0, %s40
      %s44 = sphi 0, %s43
      %s60 = sphi 0, %s44
      %s64 = sphi 0, %s64
      %s66 = sphi 0, %s64
      %s67 = sphi 0, %s66
      %s81 = sphi 0, %s67
      %s85 = sphi 0, %s85
      %s87 = sphi 0, %s85
      %s88 = sphi 0, %s87
      %s102 = sphi 0, %s88
      %s106 = sphi 0, %s106
      %s108 = sphi 0, %s106
      %s109 = sphi 0, %s108
      %s123 = sphi 0, %s109
      %s127 = sphi 0, %s127
      %s129 = sphi 0, %s127
      %s130 = sphi 0, %s129
      %s144 = sphi 0, %s130
      %s148 = sphi 0, %s148
      %s150 = sphi 0, %s148
      %s151 = sphi 0, %s150
      %s165 = sphi 0, %s151
      %s169 = sphi 0, %s169
      %s171 = sphi 0, %s169
      %s172 = sphi 0, %s171
      %s186 = sphi 0, %s172
      %s190 = sphi 0, %s190
      %s192 = sphi 0, %s190
      %s193 = sphi 0, %s192
      %s207 = sphi 0, %s193
      %s211 = sphi 0, %s211
      %s213 = sphi 0, %s211
      %s214 = sphi 0, %s213
      %s228 = sphi 0, %s214
      %s232 = sphi 0, %s232
      %s234 = sphi 0, %s232
      %s235 = sphi 0, %s234
      %s249 = sphi 0, %s235
      %s253 = sphi 0, %s253
      %s255 = sphi 0, %s253
      %s256 = sphi 0, %s255
      %s270 = sphi 0, %s256
      %s274 = sphi 0, %s274
      %s276 = sphi 0, %s274
      %s277 = sphi 0, %s276
      %s291 = sphi 0, %s277
      %s295 = sphi 0, %s295
      %s297 = sphi 0, %s295
      %s298 = sphi 0, %s297
      %s312 = sphi 0, %s298
      %s318 = sphi 0, %s320
      %s321 = sphi 0, %s318
      %s322 = sphi 0, %s321
      %s338 = sphi 0, %s322
    $region4: #{tpu_custom_call.1} parent=1 // loop_header_branch
      %33 = sbr.rel (%p31) target = $region8
    $region5: #{tpu_custom_call.1} parent=1 // loop_body
      %s35 = ssub.s32 %s30, 1
      %s36 = ssub.s32 %s30, 2
      %s37 = sadd.s32 %s30, 1
      %s38 = ssub.s32 %s30, %s37
      %p39 = scmp.eq.s32.totalorder %s38, 0
      %s41 = sadd.s32 %s40, 1
      %s42 = scalar_select %p39, %s40, %s41
      %p45 = pneg %p39
      %p46 = scmp.eq.s32.totalorder %s30, 1
      %p47 = por %p45, %p46
      %p48 = scmp.ne.s32.totalorder %s40, %s43
      %p49 = scmp.eq.s32.totalorder %s30, 0
      %p50 = por %p48, %p49
      %p51 = scmp.ne.s32.totalorder %s40, %s43
      %p52 = scmp.eq.s32.totalorder %s35, 1
      %p53 = por %p51, %p52
      %p54 = scmp.ne.s32.totalorder %s43, %s44
      %p55 = scmp.eq.s32.totalorder %s35, 0
      %p56 = por %p54, %p55
      %p57 = scmp.ne.s32.totalorder %s43, %s44
      %p58 = scmp.eq.s32.totalorder %s36, 1
      %p59 = por %p57, %p58
      %p61 = scmp.ne.s32.totalorder %s44, %s60
      %p62 = scmp.eq.s32.totalorder %s36, 0
      %p63 = por %p61, %p62
      %s65 = sadd.s32 %s64, 1
      %p68 = scmp.eq.s32.totalorder %s30, 1
      %p69 = scmp.ne.s32.totalorder %s64, %s66
      %p70 = scmp.eq.s32.totalorder %s30, 0
      %p71 = por %p69, %p70
      %p72 = scmp.ne.s32.totalorder %s64, %s66
      %p73 = scmp.eq.s32.totalorder %s35, 1
      %p74 = por %p72, %p73
      %p75 = scmp.ne.s32.totalorder %s66, %s67
      %p76 = scmp.eq.s32.totalorder %s35, 0
      %p77 = por %p75, %p76
      %p78 = scmp.ne.s32.totalorder %s66, %s67
      %p79 = scmp.eq.s32.totalorder %s36, 1
      %p80 = por %p78, %p79
      %p82 = scmp.ne.s32.totalorder %s67, %s81
      %p83 = scmp.eq.s32.totalorder %s36, 0
      %p84 = por %p82, %p83
      %s86 = sadd.s32 %s85, 1
      %p89 = scmp.eq.s32.totalorder %s30, 1
      %p90 = scmp.ne.s32.totalorder %s85, %s87
      %p91 = scmp.eq.s32.totalorder %s30, 0
      %p92 = por %p90, %p91
      %p93 = scmp.ne.s32.totalorder %s85, %s87
      %p94 = scmp.eq.s32.totalorder %s35, 1
      %p95 = por %p93, %p94
      %p96 = scmp.ne.s32.totalorder %s87, %s88
      %p97 = scmp.eq.s32.totalorder %s35, 0
      %p98 = por %p96, %p97
      %p99 = scmp.ne.s32.totalorder %s87, %s88
      %p100 = scmp.eq.s32.totalorder %s36, 1
      %p101 = por %p99, %p100
      %p103 = scmp.ne.s32.totalorder %s88, %s102
      %p104 = scmp.eq.s32.totalorder %s36, 0
      %p105 = por %p103, %p104
      %s107 = sadd.s32 %s106, 1
      %p110 = scmp.eq.s32.totalorder %s30, 1
      %p111 = scmp.ne.s32.totalorder %s106, %s108
      %p112 = scmp.eq.s32.totalorder %s30, 0
      %p113 = por %p111, %p112
      %p114 = scmp.ne.s32.totalorder %s106, %s108
      %p115 = scmp.eq.s32.totalorder %s35, 1
      %p116 = por %p114, %p115
      %p117 = scmp.ne.s32.totalorder %s108, %s109
      %p118 = scmp.eq.s32.totalorder %s35, 0
      %p119 = por %p117, %p118
      %p120 = scmp.ne.s32.totalorder %s108, %s109
      %p121 = scmp.eq.s32.totalorder %s36, 1
      %p122 = por %p120, %p121
      %p124 = scmp.ne.s32.totalorder %s109, %s123
      %p125 = scmp.eq.s32.totalorder %s36, 0
      %p126 = por %p124, %p125
      %s128 = sadd.s32 %s127, 1
      %p131 = scmp.eq.s32.totalorder %s30, 1
      %p132 = scmp.ne.s32.totalorder %s127, %s129
      %p133 = scmp.eq.s32.totalorder %s30, 0
      %p134 = por %p132, %p133
      %p135 = scmp.ne.s32.totalorder %s127, %s129
      %p136 = scmp.eq.s32.totalorder %s35, 1
      %p137 = por %p135, %p136
      %p138 = scmp.ne.s32.totalorder %s129, %s130
      %p139 = scmp.eq.s32.totalorder %s35, 0
      %p140 = por %p138, %p139
      %p141 = scmp.ne.s32.totalorder %s129, %s130
      %p142 = scmp.eq.s32.totalorder %s36, 1
      %p143 = por %p141, %p142
      %p145 = scmp.ne.s32.totalorder %s130, %s144
      %p146 = scmp.eq.s32.totalorder %s36, 0
      %p147 = por %p145, %p146
      %s149 = sadd.s32 %s148, 1
      %p152 = scmp.eq.s32.totalorder %s30, 1
      %p153 = scmp.ne.s32.totalorder %s148, %s150
      %p154 = scmp.eq.s32.totalorder %s30, 0
      %p155 = por %p153, %p154
      %p156 = scmp.ne.s32.totalorder %s148, %s150
      %p157 = scmp.eq.s32.totalorder %s35, 1
      %p158 = por %p156, %p157
      %p159 = scmp.ne.s32.totalorder %s150, %s151
      %p160 = scmp.eq.s32.totalorder %s35, 0
      %p161 = por %p159, %p160
      %p162 = scmp.ne.s32.totalorder %s150, %s151
      %p163 = scmp.eq.s32.totalorder %s36, 1
      %p164 = por %p162, %p163
      %p166 = scmp.ne.s32.totalorder %s151, %s165
      %p167 = scmp.eq.s32.totalorder %s36, 0
      %p168 = por %p166, %p167
      %s170 = sadd.s32 %s169, 1
      %p173 = scmp.eq.s32.totalorder %s30, 1
      %p174 = scmp.ne.s32.totalorder %s169, %s171
      %p175 = scmp.eq.s32.totalorder %s30, 0
      %p176 = por %p174, %p175
      %p177 = scmp.ne.s32.totalorder %s169, %s171
      %p178 = scmp.eq.s32.totalorder %s35, 1
      %p179 = por %p177, %p178
      %p180 = scmp.ne.s32.totalorder %s171, %s172
      %p181 = scmp.eq.s32.totalorder %s35, 0
      %p182 = por %p180, %p181
      %p183 = scmp.ne.s32.totalorder %s171, %s172
      %p184 = scmp.eq.s32.totalorder %s36, 1
      %p185 = por %p183, %p184
      %p187 = scmp.ne.s32.totalorder %s172, %s186
      %p188 = scmp.eq.s32.totalorder %s36, 0
      %p189 = por %p187, %p188
      %s191 = sadd.s32 %s190, 1
      %p194 = scmp.eq.s32.totalorder %s30, 1
      %p195 = scmp.ne.s32.totalorder %s190, %s192
      %p196 = scmp.eq.s32.totalorder %s30, 0
      %p197 = por %p195, %p196
      %p198 = scmp.ne.s32.totalorder %s190, %s192
      %p199 = scmp.eq.s32.totalorder %s35, 1
      %p200 = por %p198, %p199
      %p201 = scmp.ne.s32.totalorder %s192, %s193
      %p202 = scmp.eq.s32.totalorder %s35, 0
      %p203 = por %p201, %p202
      %p204 = scmp.ne.s32.totalorder %s192, %s193
      %p205 = scmp.eq.s32.totalorder %s36, 1
      %p206 = por %p204, %p205
      %p208 = scmp.ne.s32.totalorder %s193, %s207
      %p209 = scmp.eq.s32.totalorder %s36, 0
      %p210 = por %p208, %p209
      %s212 = sadd.s32 %s211, 1
      %p215 = scmp.eq.s32.totalorder %s30, 1
      %p216 = scmp.ne.s32.totalorder %s211, %s213
      %p217 = scmp.eq.s32.totalorder %s30, 0
      %p218 = por %p216, %p217
      %p219 = scmp.ne.s32.totalorder %s211, %s213
      %p220 = scmp.eq.s32.totalorder %s35, 1
      %p221 = por %p219, %p220
      %p222 = scmp.ne.s32.totalorder %s213, %s214
      %p223 = scmp.eq.s32.totalorder %s35, 0
      %p224 = por %p222, %p223
      %p225 = scmp.ne.s32.totalorder %s213, %s214
      %p226 = scmp.eq.s32.totalorder %s36, 1
      %p227 = por %p225, %p226
      %p229 = scmp.ne.s32.totalorder %s214, %s228
      %p230 = scmp.eq.s32.totalorder %s36, 0
      %p231 = por %p229, %p230
      %s233 = sadd.s32 %s232, 1
      %p236 = scmp.eq.s32.totalorder %s30, 1
      %p237 = scmp.ne.s32.totalorder %s232, %s234
      %p238 = scmp.eq.s32.totalorder %s30, 0
      %p239 = por %p237, %p238
      %p240 = scmp.ne.s32.totalorder %s232, %s234
      %p241 = scmp.eq.s32.totalorder %s35, 1
      %p242 = por %p240, %p241
      %p243 = scmp.ne.s32.totalorder %s234, %s235
      %p244 = scmp.eq.s32.totalorder %s35, 0
      %p245 = por %p243, %p244
      %p246 = scmp.ne.s32.totalorder %s234, %s235
      %p247 = scmp.eq.s32.totalorder %s36, 1
      %p248 = por %p246, %p247
      %p250 = scmp.ne.s32.totalorder %s235, %s249
      %p251 = scmp.eq.s32.totalorder %s36, 0
      %p252 = por %p250, %p251
      %s254 = sadd.s32 %s253, 1
      %p257 = scmp.eq.s32.totalorder %s30, 1
      %p258 = scmp.ne.s32.totalorder %s253, %s255
      %p259 = scmp.eq.s32.totalorder %s30, 0
      %p260 = por %p258, %p259
      %p261 = scmp.ne.s32.totalorder %s253, %s255
      %p262 = scmp.eq.s32.totalorder %s35, 1
      %p263 = por %p261, %p262
      %p264 = scmp.ne.s32.totalorder %s255, %s256
      %p265 = scmp.eq.s32.totalorder %s35, 0
      %p266 = por %p264, %p265
      %p267 = scmp.ne.s32.totalorder %s255, %s256
      %p268 = scmp.eq.s32.totalorder %s36, 1
      %p269 = por %p267, %p268
      %p271 = scmp.ne.s32.totalorder %s256, %s270
      %p272 = scmp.eq.s32.totalorder %s36, 0
      %p273 = por %p271, %p272
      %s275 = sadd.s32 %s274, 1
      %p278 = scmp.eq.s32.totalorder %s30, 1
      %p279 = scmp.ne.s32.totalorder %s274, %s276
      %p280 = scmp.eq.s32.totalorder %s30, 0
      %p281 = por %p279, %p280
      %p282 = scmp.ne.s32.totalorder %s274, %s276
      %p283 = scmp.eq.s32.totalorder %s35, 1
      %p284 = por %p282, %p283
      %p285 = scmp.ne.s32.totalorder %s276, %s277
      %p286 = scmp.eq.s32.totalorder %s35, 0
      %p287 = por %p285, %p286
      %p288 = scmp.ne.s32.totalorder %s276, %s277
      %p289 = scmp.eq.s32.totalorder %s36, 1
      %p290 = por %p288, %p289
      %p292 = scmp.ne.s32.totalorder %s277, %s291
      %p293 = scmp.eq.s32.totalorder %s36, 0
      %p294 = por %p292, %p293
      %s296 = sadd.s32 %s295, 1
      %p299 = scmp.eq.s32.totalorder %s30, 1
      %p300 = scmp.ne.s32.totalorder %s295, %s297
      %p301 = scmp.eq.s32.totalorder %s30, 0
      %p302 = por %p300, %p301
      %p303 = scmp.ne.s32.totalorder %s295, %s297
      %p304 = scmp.eq.s32.totalorder %s35, 1
      %p305 = por %p303, %p304
      %p306 = scmp.ne.s32.totalorder %s297, %s298
      %p307 = scmp.eq.s32.totalorder %s35, 0
      %p308 = por %p306, %p307
      %p309 = scmp.ne.s32.totalorder %s297, %s298
      %p310 = scmp.eq.s32.totalorder %s36, 1
      %p311 = por %p309, %p310
      %p313 = scmp.ne.s32.totalorder %s298, %s312
      %p314 = scmp.eq.s32.totalorder %s36, 0
      %p315 = por %p313, %p314
      %s316 = ssub.s32 %s30, %s37
      %p317 = scmp.eq.s32.totalorder %s316, 0
      %s319 = sadd.s32 %s318, 1
      %s320 = scalar_select %p317, %s318, %s319
      %p323 = pneg %p317
      %p324 = scmp.eq.s32.totalorder %s30, 1
      %p325 = por %p323, %p324
      %p326 = scmp.ne.s32.totalorder %s318, %s321
      %p327 = scmp.eq.s32.totalorder %s30, 0
      %p328 = por %p326, %p327
      %p329 = scmp.ne.s32.totalorder %s318, %s321
      %p330 = scmp.eq.s32.totalorder %s35, 1
      %p331 = por %p329, %p330
      %p332 = scmp.ne.s32.totalorder %s321, %s322
      %p333 = scmp.eq.s32.totalorder %s35, 0
      %p334 = por %p332, %p333
      %p335 = scmp.ne.s32.totalorder %s321, %s322
      %p336 = scmp.eq.s32.totalorder %s36, 1
      %p337 = por %p335, %p336
      %p339 = scmp.ne.s32.totalorder %s322, %s338
      %p340 = scmp.eq.s32.totalorder %s36, 0
      %p341 = por %p339, %p340
      %p342 = scmp.le.s32.totalorder 1, %s30
      %p343 = scmp.lt.s32.totalorder %s30, 3
      %p344 = pnand %p342, %p343
      %p345 = pneg %p344
      // Predicated region
      $region9: #{tpu_custom_call.1} parent=5 // pred_check
        _
      $region10: #{tpu_custom_call.1} parent=5 // pred_check_branch
        %347 = sbr.rel (%p344) target = $region12
      $region11: #{tpu_custom_call.1} parent=5 // pred_region
        %s348 = ssub.s32 %s30, 1
        // Predicated region
        $region13: #{tpu_custom_call.1} parent=11 // pred_check
          %p349 = pneg %p77
        $region14: #{tpu_custom_call.1} parent=11 // pred_check_branch
          %351 = sbr.rel (%p349) target = $region16
        $region15: #{tpu_custom_call.1} parent=11 // pred_region
          %353 = vsyncadd [#allocation6], 0
          %s355 = sshll.u32 %s1, 4
          %s356 = int_to_ptr.hbm [resolvable:$true] %s355
          %s357 = sshll.u32 [#allocation5], 4
          %s358 = int_to_ptr.vmem [resolvable:$true] %s357
          %360 = dma.hbm_to_vmem [thread:$0]  %s356, 16, %s358, [#allocation6]
        $region16: #{tpu_custom_call.1} parent=11 // pred_fallthru
          _
        // Predicated region
        $region17: #{tpu_custom_call.1} parent=11 // pred_check
          %p361 = pneg %p98
        $region18: #{tpu_custom_call.1} parent=11 // pred_check_branch
          %363 = sbr.rel (%p361) target = $region20
        $region19: #{tpu_custom_call.1} parent=11 // pred_region
          %365 = vsyncadd [#allocation6], 0
          %s367 = sshll.u32 %s2, 4
          %s368 = int_to_ptr.hbm [resolvable:$true] %s367
          %s369 = sshll.u32 [#allocation7], 4
          %s370 = int_to_ptr.vmem [resolvable:$true] %s369
          %372 = dma.hbm_to_vmem [thread:$0]  %s368, 16, %s370, [#allocation6]
        $region20: #{tpu_custom_call.1} parent=11 // pred_fallthru
          _
        // Predicated region
        $region21: #{tpu_custom_call.1} parent=11 // pred_check
          %p373 = pneg %p119
        $region22: #{tpu_custom_call.1} parent=11 // pred_check_branch
          %375 = sbr.rel (%p373) target = $region24
        $region23: #{tpu_custom_call.1} parent=11 // pred_region
          %377 = vsyncadd [#allocation9], 0
          %s378 = sshll.u32 %s3, 4
          %s379 = int_to_ptr.hbm [resolvable:$true] %s378
          %s380 = sshll.u32 [#allocation8], 4
          %s381 = int_to_ptr.vmem [resolvable:$true] %s380
          %386 = dma.hbm_to_vmem [thread:$0]  %s379, 3072, %s381, [#allocation9], 192, 192, 12
        $region24: #{tpu_custom_call.1} parent=11 // pred_fallthru
          _
        // Predicated region
        $region25: #{tpu_custom_call.1} parent=11 // pred_check
          %p387 = pneg %p140
        $region26: #{tpu_custom_call.1} parent=11 // pred_check_branch
          %389 = sbr.rel (%p387) target = $region28
        $region27: #{tpu_custom_call.1} parent=11 // pred_region
          _
        $region28: #{tpu_custom_call.1} parent=11 // pred_fallthru
          _
        // Predicated region
        $region29: #{tpu_custom_call.1} parent=11 // pred_check
          %p390 = pneg %p161
        $region30: #{tpu_custom_call.1} parent=11 // pred_check_branch
          %392 = sbr.rel (%p390) target = $region32
        $region31: #{tpu_custom_call.1} parent=11 // pred_region
          %394 = vsyncadd [#allocation9], 0
          %s395 = sshll.u32 %s5, 4
          %s396 = int_to_ptr.hbm [resolvable:$true] %s395
          %s397 = sshll.u32 [#allocation10], 4
          %s398 = int_to_ptr.vmem [resolvable:$true] %s397
          %403 = dma.hbm_to_vmem [thread:$0]  %s396, 1024, %s398, [#allocation9], 64, 64, 4
        $region32: #{tpu_custom_call.1} parent=11 // pred_fallthru
          _
        // Predicated region
        $region33: #{tpu_custom_call.1} parent=11 // pred_check
          %p404 = pneg %p182
        $region34: #{tpu_custom_call.1} parent=11 // pred_check_branch
          %406 = sbr.rel (%p404) target = $region36
        $region35: #{tpu_custom_call.1} parent=11 // pred_region
          %408 = vsyncadd [#allocation12], 0
          %s410 = sshll.u32 %s6, 4
          %s411 = int_to_ptr.hbm [resolvable:$true] %s410
          %s412 = sshll.u32 [#allocation11], 4
          %s413 = int_to_ptr.vmem [resolvable:$true] %s412
          %415 = dma.hbm_to_vmem [thread:$0]  %s411, 16, %s413, [#allocation12]
        $region36: #{tpu_custom_call.1} parent=11 // pred_fallthru
          _
        // Predicated region
        $region37: #{tpu_custom_call.1} parent=11 // pred_check
          %p416 = pneg %p203
        $region38: #{tpu_custom_call.1} parent=11 // pred_check_branch
          %418 = sbr.rel (%p416) target = $region40
        $region39: #{tpu_custom_call.1} parent=11 // pred_region
          %420 = vsyncadd [#allocation12], 0
          %s422 = sshll.u32 %s7, 4
          %s423 = int_to_ptr.hbm [resolvable:$true] %s422
          %s424 = sshll.u32 [#allocation13], 4
          %s425 = int_to_ptr.vmem [resolvable:$true] %s424
          %427 = dma.hbm_to_vmem [thread:$0]  %s423, 16, %s425, [#allocation12]
        $region40: #{tpu_custom_call.1} parent=11 // pred_fallthru
          _
        // Predicated region
        $region41: #{tpu_custom_call.1} parent=11 // pred_check
          %p428 = pneg %p224
        $region42: #{tpu_custom_call.1} parent=11 // pred_check_branch
          %430 = sbr.rel (%p428) target = $region44
        $region43: #{tpu_custom_call.1} parent=11 // pred_region
          %432 = vsyncadd [#allocation15], 0
          %s434 = sshll.u32 %s8, 4
          %s435 = int_to_ptr.hbm [resolvable:$true] %s434
          %s436 = sshll.u32 [#allocation14], 4
          %s437 = int_to_ptr.vmem [resolvable:$true] %s436
          %439 = dma.hbm_to_vmem [thread:$0]  %s435, 16, %s437, [#allocation15]
        $region44: #{tpu_custom_call.1} parent=11 // pred_fallthru
          _
        // Predicated region
        $region45: #{tpu_custom_call.1} parent=11 // pred_check
          %p440 = pneg %p245
        $region46: #{tpu_custom_call.1} parent=11 // pred_check_branch
          %442 = sbr.rel (%p440) target = $region48
        $region47: #{tpu_custom_call.1} parent=11 // pred_region
          %444 = vsyncadd [#allocation15], 0
          %s445 = sshll.u32 %s9, 4
          %s446 = int_to_ptr.hbm [resolvable:$true] %s445
          %s447 = sshll.u32 [#allocation16], 4
          %s448 = int_to_ptr.vmem [resolvable:$true] %s447
          %453 = dma.hbm_to_vmem [thread:$0]  %s446, 4096, %s448, [#allocation15], 256, 256, 16
        $region48: #{tpu_custom_call.1} parent=11 // pred_fallthru
          _
        // Predicated region
        $region49: #{tpu_custom_call.1} parent=11 // pred_check
          %p454 = pneg %p266
        $region50: #{tpu_custom_call.1} parent=11 // pred_check_branch
          %456 = sbr.rel (%p454) target = $region52
        $region51: #{tpu_custom_call.1} parent=11 // pred_region
          _
        $region52: #{tpu_custom_call.1} parent=11 // pred_fallthru
          _
        // Predicated region
        $region53: #{tpu_custom_call.1} parent=11 // pred_check
          %p457 = pneg %p287
        $region54: #{tpu_custom_call.1} parent=11 // pred_check_branch
          %459 = sbr.rel (%p457) target = $region56
        $region55: #{tpu_custom_call.1} parent=11 // pred_region
          %461 = vsyncadd [#allocation18], 0
          %s462 = sshll.u32 %s11, 4
          %s463 = int_to_ptr.hbm [resolvable:$true] %s462
          %s464 = sshll.u32 [#allocation17], 4
          %s465 = int_to_ptr.vmem [resolvable:$true] %s464
          %470 = dma.hbm_to_vmem [thread:$0]  %s463, 4096, %s465, [#allocation18], 64, 64, 4
        $region56: #{tpu_custom_call.1} parent=11 // pred_fallthru
          _
        // Predicated region
        $region57: #{tpu_custom_call.1} parent=11 // pred_check
          %p471 = pneg %p308
        $region58: #{tpu_custom_call.1} parent=11 // pred_check_branch
          %473 = sbr.rel (%p471) target = $region60
        $region59: #{tpu_custom_call.1} parent=11 // pred_region
          _
        $region60: #{tpu_custom_call.1} parent=11 // pred_fallthru
          _
      $region12: #{tpu_custom_call.1} parent=5 // pred_fallthru
        _
      %p474 = scmp.lt.s32.totalorder %s30, 2
      // Predicated region
      $region61: #{tpu_custom_call.1} parent=5 // pred_check
        %p475 = pneg %p474
      $region62: #{tpu_custom_call.1} parent=5 // pred_check_branch
        %477 = sbr.rel (%p475) target = $region64
      $region63: #{tpu_custom_call.1} parent=5 // pred_region
        // Predicated region
        $region65: #{tpu_custom_call.1} parent=63 // pred_check
          %p478 = pneg %p50
        $region66: #{tpu_custom_call.1} parent=63 // pred_check_branch
          %480 = sbr.rel (%p478) target = $region68
        $region67: #{tpu_custom_call.1} parent=63 // pred_region
          %s481 = sand.u32 %s40, 1
          %s482 = scalar_lea.sflag [#allocation3], %s481
          %s483 = sand.u32 %s40, 1
          %s484 = smul.addr %s483, 8
          %s485 = scalar_lea.vmem [#allocation2], %s484
          %487 = vsyncadd %s482, 0
          %s488 = smul.addr %s30, 8
          %s489 = scalar_lea.hbm %s0, %s488
          %s491 = sshll.u32 %s489, 4
          %s492 = int_to_ptr.hbm [resolvable:$true] %s491
          %s493 = sshll.u32 %s485, 4
          %s494 = int_to_ptr.vmem [resolvable:$true] %s493
          %496 = dma.hbm_to_vmem [thread:$0]  %s492, 128, %s494, %s482
        $region68: #{tpu_custom_call.1} parent=63 // pred_fallthru
          _
      $region64: #{tpu_custom_call.1} parent=5 // pred_fallthru
        _
      %p497 = scmp.le.s32.totalorder 1, %s30
      %p498 = scmp.lt.s32.totalorder %s30, 3
      %p499 = pnand %p497, %p498
      %p500 = pneg %p499
      // Predicated region
      $region69: #{tpu_custom_call.1} parent=5 // pred_check
        _
      $region70: #{tpu_custom_call.1} parent=5 // pred_check_branch
        %502 = sbr.rel (%p499) target = $region72
      $region71: #{tpu_custom_call.1} parent=5 // pred_region
        %s503 = ssub.s32 %s30, 1
        %s504 = sand.u32 %s43, 1
        %s505 = scalar_lea.sflag [#allocation3], %s504
        %s506 = sand.u32 %s43, 1
        %s507 = smul.addr %s506, 8
        %s508 = scalar_lea.vmem [#allocation2], %s507
        // Predicated region
        $region73: #{tpu_custom_call.1} parent=71 // pred_check
          %p509 = pneg %p56
        $region74: #{tpu_custom_call.1} parent=71 // pred_check_branch
          %511 = sbr.rel (%p509) target = $region76
        $region75: #{tpu_custom_call.1} parent=71 // pred_region
          %513 = dma.done %s505, 128
        $region76: #{tpu_custom_call.1} parent=71 // pred_fallthru
          _
        // Predicated region
        $region77: #{tpu_custom_call.1} parent=71 // pred_check
          %p514 = pneg %p77
        $region78: #{tpu_custom_call.1} parent=71 // pred_check_branch
          %516 = sbr.rel (%p514) target = $region80
        $region79: #{tpu_custom_call.1} parent=71 // pred_region
          %518 = dma.done [#allocation6], 16
        $region80: #{tpu_custom_call.1} parent=71 // pred_fallthru
          _
        // Predicated region
        $region81: #{tpu_custom_call.1} parent=71 // pred_check
          %p519 = pneg %p98
        $region82: #{tpu_custom_call.1} parent=71 // pred_check_branch
          %521 = sbr.rel (%p519) target = $region84
        $region83: #{tpu_custom_call.1} parent=71 // pred_region
          %523 = dma.done [#allocation6], 16
        $region84: #{tpu_custom_call.1} parent=71 // pred_fallthru
          _
        // Predicated region
        $region85: #{tpu_custom_call.1} parent=71 // pred_check
          %p524 = pneg %p119
        $region86: #{tpu_custom_call.1} parent=71 // pred_check_branch
          %526 = sbr.rel (%p524) target = $region88
        $region87: #{tpu_custom_call.1} parent=71 // pred_region
          %528 = dma.done [#allocation9], 3072
        $region88: #{tpu_custom_call.1} parent=71 // pred_fallthru
          _
        // Predicated region
        $region89: #{tpu_custom_call.1} parent=71 // pred_check
          %p529 = pneg %p161
        $region90: #{tpu_custom_call.1} parent=71 // pred_check_branch
          %531 = sbr.rel (%p529) target = $region92
        $region91: #{tpu_custom_call.1} parent=71 // pred_region
          %533 = dma.done [#allocation9], 1024
        $region92: #{tpu_custom_call.1} parent=71 // pred_fallthru
          _
        // Predicated region
        $region93: #{tpu_custom_call.1} parent=71 // pred_check
          %p534 = pneg %p182
        $region94: #{tpu_custom_call.1} parent=71 // pred_check_branch
          %536 = sbr.rel (%p534) target = $region96
        $region95: #{tpu_custom_call.1} parent=71 // pred_region
          %538 = dma.done [#allocation12], 16
        $region96: #{tpu_custom_call.1} parent=71 // pred_fallthru
          _
        // Predicated region
        $region97: #{tpu_custom_call.1} parent=71 // pred_check
          %p539 = pneg %p203
        $region98: #{tpu_custom_call.1} parent=71 // pred_check_branch
          %541 = sbr.rel (%p539) target = $region100
        $region99: #{tpu_custom_call.1} parent=71 // pred_region
          %543 = dma.done [#allocation12], 16
        $region100: #{tpu_custom_call.1} parent=71 // pred_fallthru
          _
        // Predicated region
        $region101: #{tpu_custom_call.1} parent=71 // pred_check
          %p544 = pneg %p224
        $region102: #{tpu_custom_call.1} parent=71 // pred_check_branch
          %546 = sbr.rel (%p544) target = $region104
        $region103: #{tpu_custom_call.1} parent=71 // pred_region
          %548 = dma.done [#allocation15], 16
        $region104: #{tpu_custom_call.1} parent=71 // pred_fallthru
          _
        // Predicated region
        $region105: #{tpu_custom_call.1} parent=71 // pred_check
          %p549 = pneg %p245
        $region106: #{tpu_custom_call.1} parent=71 // pred_check_branch
          %551 = sbr.rel (%p549) target = $region108
        $region107: #{tpu_custom_call.1} parent=71 // pred_region
          %553 = dma.done [#allocation15], 4096
        $region108: #{tpu_custom_call.1} parent=71 // pred_fallthru
          _
        // Predicated region
        $region109: #{tpu_custom_call.1} parent=71 // pred_check
          %p554 = pneg %p287
        $region110: #{tpu_custom_call.1} parent=71 // pred_check_branch
          %556 = sbr.rel (%p554) target = $region112
        $region111: #{tpu_custom_call.1} parent=71 // pred_region
          %558 = dma.done [#allocation18], 4096
        $region112: #{tpu_custom_call.1} parent=71 // pred_fallthru
          _
        %s559 = sand.u32 %s43, 1
        %s560 = scalar_lea.sflag [#allocation3], %s559
        %s561 = sand.u32 %s43, 1
        %s562 = smul.addr %s561, 8
        %s563 = scalar_lea.vmem [#allocation2], %s562
        %p564 = pneg %p56
        %p565 = pneg %p53
        %p566 = pneg %p77
        %p567 = pneg %p74
        %p568 = pneg %p98
        %p569 = pneg %p95
        %p570 = pneg %p119
        %p571 = pneg %p116
        %p572 = pneg %p140
        %p573 = pneg %p137
        %p574 = pneg %p161
        %p575 = pneg %p158
        %p576 = pneg %p182
        %p577 = pneg %p179
        %p578 = pneg %p203
        %p579 = pneg %p200
        %p580 = pneg %p224
        %p581 = pneg %p221
        %p582 = pneg %p245
        %p583 = pneg %p242
        %p584 = pneg %p266
        %p585 = pneg %p263
        %p586 = pneg %p287
        %p587 = pneg %p284
        %p588 = pneg %p308
        %p589 = pneg %p305
        %p590 = pneg %p334
        %p591 = pneg %p331
        %s592 = sand.u32 %s321, 1
        %s593 = scalar_lea.sflag [#allocation4], %s592
        %s594 = sand.u32 %s321, 1
        %s595 = smul.addr %s594, 8
        %s596 = scalar_lea.vmem [#allocation19], %s595
        %v598 = vld [vmem:[%s508] sm:$0xff]
        %599 = vadd.xlane.f32.xlu0 %v598
        %v600 = vpop.xlane.xlu0 %599
        %v601 = vrcp.pop 128.0
        %v602 = vmul.f32 128.0, %v601
        %v603 = vsub.f32 1.0, %v602
        %v604 = vmul.f32 %v601, %v603
        %v605 = vadd.f32 %v601, %v604
        %vm606 = vweird.f32 %v601
        %v607 = vsel %vm606, %v601, %v605
        %v608 = vmul.f32 %v600, %v607
        %v609 = vsub.f32 %v598, %v608
        %v610 = vmul.f32 %v609, %v609
        %611 = vadd.xlane.f32.xlu0 %v610
        %v612 = vpop.xlane.xlu0 %611
        %v613 = vmul.f32 %v612, %v607
        %v614 = vadd.f32 %v613, 1e-05
        %v615 = vrsqrt.pop %v614
        %v616 = vmul.f32 %v615, %v614
        %v617 = vmul.f32 %v616, %v615
        %v618 = vmul.f32 0.5, %v617
        %v619 = vsub.f32 1.5, %v618
        %v620 = vmul.f32 %v615, %v619
        %vm621 = vweird.f32 %v614
        %vm622 = vweird.f32 %v615
        %vm623 = vmor %vm621, %vm622
        %v624 = vsel %vm623, %v615, %v620
        %v625 = vmul.f32 %v609, %v624
        %v626 = vld [vmem:[#allocation5] sm:$0x1]
        %v628 = vperm.slane %v626, 0
        %v630 = vmul.f32 %v625, %v628
        %v631 = vld [vmem:[#allocation7] sm:$0x1]
        %v633 = vperm.slane %v631, 0
        %v635 = vadd.f32 %v630, %v633
        %v636 = vpack.c.bf16 %v635, %v635
        %v637 = vld [vmem:[#allocation8] sm:$0xff]
        %v638 = vld [vmem:[#allocation8 + $0x8] sm:$0xf]
        %v639 = vld [vmem:[#allocation8 + $0xc] sm:$0xff]
        %v640 = vld [vmem:[#allocation8 + $0x14] sm:$0xf]
        %v641 = vld [vmem:[#allocation8 + $0x18] sm:$0xff]
        %v642 = vld [vmem:[#allocation8 + $0x20] sm:$0xf]
        %v643 = vld [vmem:[#allocation8 + $0x24] sm:$0xff]
        %v644 = vld [vmem:[#allocation8 + $0x2c] sm:$0xf]
        %v645 = vld [vmem:[#allocation8 + $0x30] sm:$0xff]
        %v646 = vld [vmem:[#allocation8 + $0x38] sm:$0xf]
        %v647 = vld [vmem:[#allocation8 + $0x3c] sm:$0xff]
        %v648 = vld [vmem:[#allocation8 + $0x44] sm:$0xf]
        %v649 = vld [vmem:[#allocation8 + $0x48] sm:$0xff]
        %v650 = vld [vmem:[#allocation8 + $0x50] sm:$0xf]
        %v651 = vld [vmem:[#allocation8 + $0x54] sm:$0xff]
        %v652 = vld [vmem:[#allocation8 + $0x5c] sm:$0xf]
        %v653 = vld [vmem:[#allocation8 + $0x60] sm:$0xff]
        %v654 = vld [vmem:[#allocation8 + $0x68] sm:$0xf]
        %v655 = vld [vmem:[#allocation8 + $0x6c] sm:$0xff]
        %v656 = vld [vmem:[#allocation8 + $0x74] sm:$0xf]
        %v657 = vld [vmem:[#allocation8 + $0x78] sm:$0xff]
        %v658 = vld [vmem:[#allocation8 + $0x80] sm:$0xf]
        %v659 = vld [vmem:[#allocation8 + $0x84] sm:$0xff]
        %v660 = vld [vmem:[#allocation8 + $0x8c] sm:$0xf]
        %v661 = vld [vmem:[#allocation8 + $0x90] sm:$0xff]
        %v662 = vld [vmem:[#allocation8 + $0x98] sm:$0xf]
        %v663 = vld [vmem:[#allocation8 + $0x9c] sm:$0xff]
        %v664 = vld [vmem:[#allocation8 + $0xa4] sm:$0xf]
        %v665 = vld [vmem:[#allocation8 + $0xa8] sm:$0xff]
        %v666 = vld [vmem:[#allocation8 + $0xb0] sm:$0xf]
        %v667 = vld [vmem:[#allocation8 + $0xb4] sm:$0xff]
        %v668 = vld [vmem:[#allocation8 + $0xbc] sm:$0xf]
        %v669 = vld [vmem:[%s4] sm:$0x7]
        %v671 = vperm.slane %v669, 0
        %v672 = vperm.slane %v669, 1
        %v673 = vperm.slane %v669, 2
        %v709 = vunpack.c.l.b16 %v637
        %v710 = vunpack.c.h.b16 %v637
        %v711 = vunpack.c.l.b16 %v638
        %v712 = vunpack.c.l.b16 %v639
        %v713 = vunpack.c.h.b16 %v639
        %v714 = vunpack.c.l.b16 %v640
        %v715 = vunpack.c.l.b16 %v641
        %v716 = vunpack.c.h.b16 %v641
        %v717 = vunpack.c.l.b16 %v642
        %v718 = vunpack.c.l.b16 %v643
        %v719 = vunpack.c.h.b16 %v643
        %v720 = vunpack.c.l.b16 %v644
        %v721 = vunpack.c.l.b16 %v645
        %v722 = vunpack.c.h.b16 %v645
        %v723 = vunpack.c.l.b16 %v646
        %v724 = vunpack.c.l.b16 %v647
        %v725 = vunpack.c.h.b16 %v647
        %v726 = vunpack.c.l.b16 %v648
        %v727 = vunpack.c.l.b16 %v649
        %v728 = vunpack.c.h.b16 %v649
        %v729 = vunpack.c.l.b16 %v650
        %v730 = vunpack.c.l.b16 %v651
        %v731 = vunpack.c.h.b16 %v651
        %v732 = vunpack.c.l.b16 %v652
        %v733 = vunpack.c.l.b16 %v653
        %v734 = vunpack.c.h.b16 %v653
        %v735 = vunpack.c.l.b16 %v654
        %v736 = vunpack.c.l.b16 %v655
        %v737 = vunpack.c.h.b16 %v655
        %v738 = vunpack.c.l.b16 %v656
        %v739 = vunpack.c.l.b16 %v657
        %v740 = vunpack.c.h.b16 %v657
        %v741 = vunpack.c.l.b16 %v658
        %v742 = vunpack.c.l.b16 %v659
        %v743 = vunpack.c.h.b16 %v659
        %v744 = vunpack.c.l.b16 %v660
        %v745 = vunpack.c.l.b16 %v661
        %v746 = vunpack.c.h.b16 %v661
        %v747 = vunpack.c.l.b16 %v662
        %v748 = vunpack.c.l.b16 %v663
        %v749 = vunpack.c.h.b16 %v663
        %v750 = vunpack.c.l.b16 %v664
        %v751 = vunpack.c.l.b16 %v665
        %v752 = vunpack.c.h.b16 %v665
        %v753 = vunpack.c.l.b16 %v666
        %v754 = vunpack.c.l.b16 %v667
        %v755 = vunpack.c.h.b16 %v667
        %v756 = vunpack.c.l.b16 %v668
        %v757 = vpack.c.b16 %v712, %v709
        %v758 = vpack.c.b16 %v713, %v710
        %v759 = vpack.c.b16 %v714, %v711
        %v760 = vpack.c.b16 %v718, %v715
        %v761 = vpack.c.b16 %v719, %v716
        %v762 = vpack.c.b16 %v720, %v717
        %v763 = vpack.c.b16 %v724, %v721
        %v764 = vpack.c.b16 %v725, %v722
        %v765 = vpack.c.b16 %v726, %v723
        %v766 = vpack.c.b16 %v730, %v727
        %v767 = vpack.c.b16 %v731, %v728
        %v768 = vpack.c.b16 %v732, %v729
        %v769 = vpack.c.b16 %v736, %v733
        %v770 = vpack.c.b16 %v737, %v734
        %v771 = vpack.c.b16 %v738, %v735
        %v772 = vpack.c.b16 %v742, %v739
        %v773 = vpack.c.b16 %v743, %v740
        %v774 = vpack.c.b16 %v744, %v741
        %v775 = vpack.c.b16 %v748, %v745
        %v776 = vpack.c.b16 %v749, %v746
        %v777 = vpack.c.b16 %v750, %v747
        %v778 = vpack.c.b16 %v754, %v751
        %v779 = vpack.c.b16 %v755, %v752
        %v780 = vpack.c.b16 %v756, %v753
        %805 = vmatpush.bf16.msra.mxu0 %v778
        %806 = vmatpush.bf16.msra.mxu0 %v775
        %807 = vmatpush.bf16.msra.mxu0 %v772
        %808 = vmatpush.bf16.msra.mxu0 %v769
        %809 = vmatpush.bf16.msra.mxu0 %v766
        %810 = vmatpush.bf16.msra.mxu0 %v763
        %811 = vmatpush.bf16.msra.mxu0 %v760
        %812 = vmatpush.bf16.msra.mxu0 %v757
        %813 = vmatmul.bf16.gmra.mxu0 %v636
        %v814 = vpop.f32.mrf.mxu0
        %v815 = vadd.f32 %v671, %v814
        %v816 = vpop.f32.mrf.mxu0
        %817 = vdwg.mxu0
        %818 = vmatpush.bf16.msra.mxu0 %v779
        %819 = vmatpush.bf16.msra.mxu0 %v776
        %820 = vmatpush.bf16.msra.mxu0 %v773
        %821 = vmatpush.bf16.msra.mxu0 %v770
        %822 = vmatpush.bf16.msra.mxu0 %v767
        %823 = vmatpush.bf16.msra.mxu0 %v764
        %824 = vmatpush.bf16.msra.mxu0 %v761
        %825 = vmatpush.bf16.msra.mxu0 %v758
        %826 = vmatmul.bf16.gmra.mxu0 %v636
        %v827 = vpop.f32.mrf.mxu0
        %v828 = vadd.f32 %v672, %v827
        %v829 = vpop.f32.mrf.mxu0
        %830 = vdwg.mxu0
        %831 = vmatpush.bf16.msra.mxu0 %v780
        %832 = vmatpush.bf16.msra.mxu0 %v777
        %833 = vmatpush.bf16.msra.mxu0 %v774
        %834 = vmatpush.bf16.msra.mxu0 %v771
        %835 = vmatpush.bf16.msra.mxu0 %v768
        %836 = vmatpush.bf16.msra.mxu0 %v765
        %837 = vmatpush.bf16.msra.mxu0 %v762
        %838 = vmatpush.bf16.msra.mxu0 %v759
        %839 = vmatmul.bf16.gmra.mxu0 %v636
        %v840 = vpop.f32.mrf.mxu0
        %v841 = vadd.f32 %v673, %v840
        %v842 = vpop.f32.mrf.mxu0
        %843 = vdwg.mxu0
        %845 = vrot.lane.b32.xlu0 %v815, 112
        %v846 = vpop.permute.xlu0 %845
        %847 = vrot.lane.b32.xlu0 %v815, 96
        %v848 = vpop.permute.xlu0 %847
        %849 = vrot.lane.b32.xlu0 %v815, 80
        %v850 = vpop.permute.xlu0 %849
        %851 = vrot.lane.b32.xlu0 %v815, 64
        %v852 = vpop.permute.xlu0 %851
        %853 = vrot.lane.b32.xlu0 %v815, 48
        %v854 = vpop.permute.xlu0 %853
        %855 = vrot.lane.b32.xlu0 %v815, 32
        %v856 = vpop.permute.xlu0 %855
        %857 = vrot.lane.b32.xlu0 %v815, 16
        %v858 = vpop.permute.xlu0 %857
        %860 = vrot.lane.b32.xlu0 %v828, 112
        %v861 = vpop.permute.xlu0 %860
        %862 = vrot.lane.b32.xlu0 %v828, 96
        %v863 = vpop.permute.xlu0 %862
        %864 = vrot.lane.b32.xlu0 %v828, 80
        %v865 = vpop.permute.xlu0 %864
        %866 = vrot.lane.b32.xlu0 %v828, 64
        %v867 = vpop.permute.xlu0 %866
        %868 = vrot.lane.b32.xlu0 %v828, 48
        %v869 = vpop.permute.xlu0 %868
        %870 = vrot.lane.b32.xlu0 %v828, 32
        %v871 = vpop.permute.xlu0 %870
        %872 = vrot.lane.b32.xlu0 %v828, 16
        %v873 = vpop.permute.xlu0 %872
        %875 = vrot.lane.b32.xlu0 %v841, 112
        %v876 = vpop.permute.xlu0 %875
        %878 = vrot.lane.b32.xlu0 %v841, 96
        %v879 = vpop.permute.xlu0 %878
        %881 = vrot.lane.b32.xlu0 %v841, 80
        %v882 = vpop.permute.xlu0 %881
        %884 = vrot.lane.b32.xlu0 %v841, 64
        %v885 = vpop.permute.xlu0 %884
        %887 = vrot.lane.b32.xlu0 %v841, 48
        %v888 = vpop.permute.xlu0 %887
        %890 = vrot.lane.b32.xlu0 %v841, 32
        %v891 = vpop.permute.xlu0 %890
        %893 = vrot.lane.b32.xlu0 %v841, 16
        %v894 = vpop.permute.xlu0 %893
        %vm896 = vcmask 130048
        %v897 = vsel %vm896, %v815, 0
        %v899 = vsel %vm896, %v828, 0
        %901 = vmatpush.xpose.msra.mxu0 0.0
        %902 = vmatpush.xpose.msra.mxu0 0.0
        %903 = vmatpush.xpose.msra.mxu0 0.0
        %904 = vmatpush.xpose.msra.mxu0 0.0
        %905 = vmatpush.xpose.msra.mxu0 0.0
        %906 = vmatpush.xpose.msra.mxu0 0.0
        %907 = vmatpush.xpose.msra.mxu0 0.0
        %908 = vmatpush.xpose.msra.mxu0 0.0
        %909 = vmatpush.xpose.msra.mxu0 0.0
        %910 = vmatpush.xpose.msra.mxu0 0.0
        %911 = vmatpush.xpose.msra.mxu0 0.0
        %912 = vmatpush.xpose.msra.mxu0 0.0
        %913 = vmatpush.xpose.msra.mxu0 0.0
        %914 = vmatpush.xpose.msra.mxu0 0.0
        %915 = vmatpush.xpose.msra.mxu0 0.0
        %916 = vmatpush.xpose.msra.mxu0 %v899
        %917 = vmatmul.f32.gmra.mxu0 %v897
        %v918 = vpop.f32.mrf.mxu0
        %v919 = vadd.f32 0.0, %v918
        %920 = vdwg.mxu0
        %v921 = vsel %vm896, %v846, 0
        %v923 = vsel %vm896, %v861, 0
        %925 = vmatpush.xpose.msra.mxu0 0.0
        %926 = vmatpush.xpose.msra.mxu0 0.0
        %927 = vmatpush.xpose.msra.mxu0 0.0
        %928 = vmatpush.xpose.msra.mxu0 0.0
        %929 = vmatpush.xpose.msra.mxu0 0.0
        %930 = vmatpush.xpose.msra.mxu0 0.0
        %931 = vmatpush.xpose.msra.mxu0 0.0
        %932 = vmatpush.xpose.msra.mxu0 0.0
        %933 = vmatpush.xpose.msra.mxu0 0.0
        %934 = vmatpush.xpose.msra.mxu0 0.0
        %935 = vmatpush.xpose.msra.mxu0 0.0
        %936 = vmatpush.xpose.msra.mxu0 0.0
        %937 = vmatpush.xpose.msra.mxu0 0.0
        %938 = vmatpush.xpose.msra.mxu0 0.0
        %939 = vmatpush.xpose.msra.mxu0 0.0
        %940 = vmatpush.xpose.msra.mxu0 %v923
        %941 = vmatmul.f32.gmra.mxu0 %v921
        %v942 = vpop.f32.mrf.mxu0
        %v943 = vadd.f32 0.0, %v942
        %944 = vdwg.mxu0
        %v945 = vsel %vm896, %v848, 0
        %v947 = vsel %vm896, %v863, 0
        %949 = vmatpush.xpose.msra.mxu0 0.0
        %950 = vmatpush.xpose.msra.mxu0 0.0
        %951 = vmatpush.xpose.msra.mxu0 0.0
        %952 = vmatpush.xpose.msra.mxu0 0.0
        %953 = vmatpush.xpose.msra.mxu0 0.0
        %954 = vmatpush.xpose.msra.mxu0 0.0
        %955 = vmatpush.xpose.msra.mxu0 0.0
        %956 = vmatpush.xpose.msra.mxu0 0.0
        %957 = vmatpush.xpose.msra.mxu0 0.0
        %958 = vmatpush.xpose.msra.mxu0 0.0
        %959 = vmatpush.xpose.msra.mxu0 0.0
        %960 = vmatpush.xpose.msra.mxu0 0.0
        %961 = vmatpush.xpose.msra.mxu0 0.0
        %962 = vmatpush.xpose.msra.mxu0 0.0
        %963 = vmatpush.xpose.msra.mxu0 0.0
        %964 = vmatpush.xpose.msra.mxu0 %v947
        %965 = vmatmul.f32.gmra.mxu0 %v945
        %v966 = vpop.f32.mrf.mxu0
        %v967 = vadd.f32 0.0, %v966
        %968 = vdwg.mxu0
        %v969 = vsel %vm896, %v850, 0
        %v971 = vsel %vm896, %v865, 0
        %973 = vmatpush.xpose.msra.mxu0 0.0
        %974 = vmatpush.xpose.msra.mxu0 0.0
        %975 = vmatpush.xpose.msra.mxu0 0.0
        %976 = vmatpush.xpose.msra.mxu0 0.0
        %977 = vmatpush.xpose.msra.mxu0 0.0
        %978 = vmatpush.xpose.msra.mxu0 0.0
        %979 = vmatpush.xpose.msra.mxu0 0.0
        %980 = vmatpush.xpose.msra.mxu0 0.0
        %981 = vmatpush.xpose.msra.mxu0 0.0
        %982 = vmatpush.xpose.msra.mxu0 0.0
        %983 = vmatpush.xpose.msra.mxu0 0.0
        %984 = vmatpush.xpose.msra.mxu0 0.0
        %985 = vmatpush.xpose.msra.mxu0 0.0
        %986 = vmatpush.xpose.msra.mxu0 0.0
        %987 = vmatpush.xpose.msra.mxu0 0.0
        %988 = vmatpush.xpose.msra.mxu0 %v971
        %989 = vmatmul.f32.gmra.mxu0 %v969
        %v990 = vpop.f32.mrf.mxu0
        %v991 = vadd.f32 0.0, %v990
        %992 = vdwg.mxu0
        %v993 = vsel %vm896, %v852, 0
        %v995 = vsel %vm896, %v867, 0
        %997 = vmatpush.xpose.msra.mxu0 0.0
        %998 = vmatpush.xpose.msra.mxu0 0.0
        %999 = vmatpush.xpose.msra.mxu0 0.0
        %1000 = vmatpush.xpose.msra.mxu0 0.0
        %1001 = vmatpush.xpose.msra.mxu0 0.0
        %1002 = vmatpush.xpose.msra.mxu0 0.0
        %1003 = vmatpush.xpose.msra.mxu0 0.0
        %1004 = vmatpush.xpose.msra.mxu0 0.0
        %1005 = vmatpush.xpose.msra.mxu0 0.0
        %1006 = vmatpush.xpose.msra.mxu0 0.0
        %1007 = vmatpush.xpose.msra.mxu0 0.0
        %1008 = vmatpush.xpose.msra.mxu0 0.0
        %1009 = vmatpush.xpose.msra.mxu0 0.0
        %1010 = vmatpush.xpose.msra.mxu0 0.0
        %1011 = vmatpush.xpose.msra.mxu0 0.0
        %1012 = vmatpush.xpose.msra.mxu0 %v995
        %1013 = vmatmul.f32.gmra.mxu0 %v993
        %v1014 = vpop.f32.mrf.mxu0
        %v1015 = vadd.f32 0.0, %v1014
        %1016 = vdwg.mxu0
        %v1017 = vsel %vm896, %v854, 0
        %v1019 = vsel %vm896, %v869, 0
        %1021 = vmatpush.xpose.msra.mxu0 0.0
        %1022 = vmatpush.xpose.msra.mxu0 0.0
        %1023 = vmatpush.xpose.msra.mxu0 0.0
        %1024 = vmatpush.xpose.msra.mxu0 0.0
        %1025 = vmatpush.xpose.msra.mxu0 0.0
        %1026 = vmatpush.xpose.msra.mxu0 0.0
        %1027 = vmatpush.xpose.msra.mxu0 0.0
        %1028 = vmatpush.xpose.msra.mxu0 0.0
        %1029 = vmatpush.xpose.msra.mxu0 0.0
        %1030 = vmatpush.xpose.msra.mxu0 0.0
        %1031 = vmatpush.xpose.msra.mxu0 0.0
        %1032 = vmatpush.xpose.msra.mxu0 0.0
        %1033 = vmatpush.xpose.msra.mxu0 0.0
        %1034 = vmatpush.xpose.msra.mxu0 0.0
        %1035 = vmatpush.xpose.msra.mxu0 0.0
        %1036 = vmatpush.xpose.msra.mxu0 %v1019
        %1037 = vmatmul.f32.gmra.mxu0 %v1017
        %v1038 = vpop.f32.mrf.mxu0
        %v1039 = vadd.f32 0.0, %v1038
        %1040 = vdwg.mxu0
        %v1041 = vsel %vm896, %v856, 0
        %v1043 = vsel %vm896, %v871, 0
        %1045 = vmatpush.xpose.msra.mxu0 0.0
        %1046 = vmatpush.xpose.msra.mxu0 0.0
        %1047 = vmatpush.xpose.msra.mxu0 0.0
        %1048 = vmatpush.xpose.msra.mxu0 0.0
        %1049 = vmatpush.xpose.msra.mxu0 0.0
        %1050 = vmatpush.xpose.msra.mxu0 0.0
        %1051 = vmatpush.xpose.msra.mxu0 0.0
        %1052 = vmatpush.xpose.msra.mxu0 0.0
        %1053 = vmatpush.xpose.msra.mxu0 0.0
        %1054 = vmatpush.xpose.msra.mxu0 0.0
        %1055 = vmatpush.xpose.msra.mxu0 0.0
        %1056 = vmatpush.xpose.msra.mxu0 0.0
        %1057 = vmatpush.xpose.msra.mxu0 0.0
        %1058 = vmatpush.xpose.msra.mxu0 0.0
        %1059 = vmatpush.xpose.msra.mxu0 0.0
        %1060 = vmatpush.xpose.msra.mxu0 %v1043
        %1061 = vmatmul.f32.gmra.mxu0 %v1041
        %v1062 = vpop.f32.mrf.mxu0
        %v1063 = vadd.f32 0.0, %v1062
        %1064 = vdwg.mxu0
        %v1065 = vsel %vm896, %v858, 0
        %v1067 = vsel %vm896, %v873, 0
        %1069 = vmatpush.xpose.msra.mxu0 0.0
        %1070 = vmatpush.xpose.msra.mxu0 0.0
        %1071 = vmatpush.xpose.msra.mxu0 0.0
        %1072 = vmatpush.xpose.msra.mxu0 0.0
        %1073 = vmatpush.xpose.msra.mxu0 0.0
        %1074 = vmatpush.xpose.msra.mxu0 0.0
        %1075 = vmatpush.xpose.msra.mxu0 0.0
        %1076 = vmatpush.xpose.msra.mxu0 0.0
        %1077 = vmatpush.xpose.msra.mxu0 0.0
        %1078 = vmatpush.xpose.msra.mxu0 0.0
        %1079 = vmatpush.xpose.msra.mxu0 0.0
        %1080 = vmatpush.xpose.msra.mxu0 0.0
        %1081 = vmatpush.xpose.msra.mxu0 0.0
        %1082 = vmatpush.xpose.msra.mxu0 0.0
        %1083 = vmatpush.xpose.msra.mxu0 0.0
        %1084 = vmatpush.xpose.msra.mxu0 %v1067
        %1085 = vmatmul.f32.gmra.mxu0 %v1065
        %v1086 = vpop.f32.mrf.mxu0
        %v1087 = vadd.f32 0.0, %v1086
        %1088 = vdwg.mxu0
        %vm1089 = vcmask 64512
        %v1090 = vsel %vm1089, %v919, -inf
        %1091 = vmax.xlane.f32.xlu0 %v1090
        %v1092 = vpop.xlane.xlu0 %1091
        %v1093 = vsel %vm1089, %v943, -inf
        %1094 = vmax.xlane.f32.xlu0 %v1093
        %v1095 = vpop.xlane.xlu0 %1094
        %v1096 = vsel %vm1089, %v967, -inf
        %1097 = vmax.xlane.f32.xlu0 %v1096
        %v1098 = vpop.xlane.xlu0 %1097
        %v1099 = vsel %vm1089, %v991, -inf
        %1100 = vmax.xlane.f32.xlu0 %v1099
        %v1101 = vpop.xlane.xlu0 %1100
        %v1102 = vsel %vm1089, %v1015, -inf
        %1103 = vmax.xlane.f32.xlu0 %v1102
        %v1104 = vpop.xlane.xlu0 %1103
        %v1105 = vsel %vm1089, %v1039, -inf
        %1106 = vmax.xlane.f32.xlu0 %v1105
        %v1107 = vpop.xlane.xlu0 %1106
        %v1108 = vsel %vm1089, %v1063, -inf
        %1109 = vmax.xlane.f32.xlu0 %v1108
        %v1110 = vpop.xlane.xlu0 %1109
        %v1111 = vsel %vm1089, %v1087, -inf
        %1112 = vmax.xlane.f32.xlu0 %v1111
        %v1113 = vpop.xlane.xlu0 %1112
        %v1114 = vsub.f32 %v919, %v1092
        %v1115 = vsub.f32 %v943, %v1095
        %v1116 = vsub.f32 %v967, %v1098
        %v1117 = vsub.f32 %v991, %v1101
        %v1118 = vsub.f32 %v1015, %v1104
        %v1119 = vsub.f32 %v1039, %v1107
        %v1120 = vsub.f32 %v1063, %v1110
        %v1121 = vsub.f32 %v1087, %v1113
        %v1122 = vmul.f32 %v1114, 1.442695
        %v1123 = vpow.pop %v1122
        %v1124 = vmul.f32 %v1115, 1.442695
        %v1125 = vpow.pop %v1124
        %v1126 = vmul.f32 %v1116, 1.442695
        %v1127 = vpow.pop %v1126
        %v1128 = vmul.f32 %v1117, 1.442695
        %v1129 = vpow.pop %v1128
        %v1130 = vmul.f32 %v1118, 1.442695
        %v1131 = vpow.pop %v1130
        %v1132 = vmul.f32 %v1119, 1.442695
        %v1133 = vpow.pop %v1132
        %v1134 = vmul.f32 %v1120, 1.442695
        %v1135 = vpow.pop %v1134
        %v1136 = vmul.f32 %v1121, 1.442695
        %v1137 = vpow.pop %v1136
        %v1138 = vsel %vm1089, %v1123, 0.0
        %1139 = vadd.xlane.f32.xlu0 %v1138
        %v1140 = vpop.xlane.xlu0 %1139
        %v1141 = vsel %vm1089, %v1125, 0.0
        %1142 = vadd.xlane.f32.xlu0 %v1141
        %v1143 = vpop.xlane.xlu0 %1142
        %v1144 = vsel %vm1089, %v1127, 0.0
        %1145 = vadd.xlane.f32.xlu0 %v1144
        %v1146 = vpop.xlane.xlu0 %1145
        %v1147 = vsel %vm1089, %v1129, 0.0
        %1148 = vadd.xlane.f32.xlu0 %v1147
        %v1149 = vpop.xlane.xlu0 %1148
        %v1150 = vsel %vm1089, %v1131, 0.0
        %1151 = vadd.xlane.f32.xlu0 %v1150
        %v1152 = vpop.xlane.xlu0 %1151
        %v1153 = vsel %vm1089, %v1133, 0.0
        %1154 = vadd.xlane.f32.xlu0 %v1153
        %v1155 = vpop.xlane.xlu0 %1154
        %v1156 = vsel %vm1089, %v1135, 0.0
        %1157 = vadd.xlane.f32.xlu0 %v1156
        %v1158 = vpop.xlane.xlu0 %1157
        %v1159 = vsel %vm1089, %v1137, 0.0
        %1160 = vadd.xlane.f32.xlu0 %v1159
        %v1161 = vpop.xlane.xlu0 %1160
        %v1162 = vrcp.pop %v1140
        %v1163 = vrcp.pop %v1143
        %v1164 = vrcp.pop %v1146
        %v1165 = vrcp.pop %v1149
        %v1166 = vrcp.pop %v1152
        %v1167 = vrcp.pop %v1155
        %v1168 = vrcp.pop %v1158
        %v1169 = vrcp.pop %v1161
        %v1170 = vmul.f32 %v1123, %v1162
        %v1171 = vmul.f32 %v1125, %v1163
        %v1172 = vmul.f32 %v1127, %v1164
        %v1173 = vmul.f32 %v1129, %v1165
        %v1174 = vmul.f32 %v1131, %v1166
        %v1175 = vmul.f32 %v1133, %v1167
        %v1176 = vmul.f32 %v1135, %v1168
        %v1177 = vmul.f32 %v1137, %v1169
        %v1179 = vsel %vm1089, %v1170, 0
        %1181 = vmatpush.msra.mxu0 0.0
        %1182 = vmatpush.msra.mxu0 0.0
        %1183 = vmatpush.msra.mxu0 0.0
        %1184 = vmatpush.msra.mxu0 0.0
        %1185 = vmatpush.msra.mxu0 0.0
        %1186 = vmatpush.msra.mxu0 0.0
        %1187 = vmatpush.msra.mxu0 0.0
        %1188 = vmatpush.msra.mxu0 0.0
        %1189 = vmatpush.msra.mxu0 0.0
        %1190 = vmatpush.msra.mxu0 0.0
        %1191 = vmatpush.msra.mxu0 0.0
        %1192 = vmatpush.msra.mxu0 0.0
        %1193 = vmatpush.msra.mxu0 0.0
        %1194 = vmatpush.msra.mxu0 0.0
        %1195 = vmatpush.msra.mxu0 0.0
        %1196 = vmatpush.msra.mxu0 %v841
        %1197 = vmatmul.f32.gmra.mxu0 %v1179
        %v1198 = vpop.f32.mrf.mxu0
        %v1199 = vadd.f32 0.0, %v1198
        %1200 = vdwg.mxu0
        %v1202 = vsel %vm1089, %v1171, 0
        %1204 = vmatpush.msra.mxu0 0.0
        %1205 = vmatpush.msra.mxu0 0.0
        %1206 = vmatpush.msra.mxu0 0.0
        %1207 = vmatpush.msra.mxu0 0.0
        %1208 = vmatpush.msra.mxu0 0.0
        %1209 = vmatpush.msra.mxu0 0.0
        %1210 = vmatpush.msra.mxu0 0.0
        %1211 = vmatpush.msra.mxu0 0.0
        %1212 = vmatpush.msra.mxu0 0.0
        %1213 = vmatpush.msra.mxu0 0.0
        %1214 = vmatpush.msra.mxu0 0.0
        %1215 = vmatpush.msra.mxu0 0.0
        %1216 = vmatpush.msra.mxu0 0.0
        %1217 = vmatpush.msra.mxu0 0.0
        %1218 = vmatpush.msra.mxu0 0.0
        %1219 = vmatpush.msra.mxu0 %v876
        %1220 = vmatmul.f32.gmra.mxu0 %v1202
        %v1221 = vpop.f32.mrf.mxu0
        %v1222 = vadd.f32 0.0, %v1221
        %1223 = vdwg.mxu0
        %v1225 = vsel %vm1089, %v1172, 0
        %1227 = vmatpush.msra.mxu0 0.0
        %1228 = vmatpush.msra.mxu0 0.0
        %1229 = vmatpush.msra.mxu0 0.0
        %1230 = vmatpush.msra.mxu0 0.0
        %1231 = vmatpush.msra.mxu0 0.0
        %1232 = vmatpush.msra.mxu0 0.0
        %1233 = vmatpush.msra.mxu0 0.0
        %1234 = vmatpush.msra.mxu0 0.0
        %1235 = vmatpush.msra.mxu0 0.0
        %1236 = vmatpush.msra.mxu0 0.0
        %1237 = vmatpush.msra.mxu0 0.0
        %1238 = vmatpush.msra.mxu0 0.0
        %1239 = vmatpush.msra.mxu0 0.0
        %1240 = vmatpush.msra.mxu0 0.0
        %1241 = vmatpush.msra.mxu0 0.0
        %1242 = vmatpush.msra.mxu0 %v879
        %1243 = vmatmul.f32.gmra.mxu0 %v1225
        %v1244 = vpop.f32.mrf.mxu0
        %v1245 = vadd.f32 0.0, %v1244
        %1246 = vdwg.mxu0
        %v1248 = vsel %vm1089, %v1173, 0
        %1250 = vmatpush.msra.mxu0 0.0
        %1251 = vmatpush.msra.mxu0 0.0
        %1252 = vmatpush.msra.mxu0 0.0
        %1253 = vmatpush.msra.mxu0 0.0
        %1254 = vmatpush.msra.mxu0 0.0
        %1255 = vmatpush.msra.mxu0 0.0
        %1256 = vmatpush.msra.mxu0 0.0
        %1257 = vmatpush.msra.mxu0 0.0
        %1258 = vmatpush.msra.mxu0 0.0
        %1259 = vmatpush.msra.mxu0 0.0
        %1260 = vmatpush.msra.mxu0 0.0
        %1261 = vmatpush.msra.mxu0 0.0
        %1262 = vmatpush.msra.mxu0 0.0
        %1263 = vmatpush.msra.mxu0 0.0
        %1264 = vmatpush.msra.mxu0 0.0
        %1265 = vmatpush.msra.mxu0 %v882
        %1266 = vmatmul.f32.gmra.mxu0 %v1248
        %v1267 = vpop.f32.mrf.mxu0
        %v1268 = vadd.f32 0.0, %v1267
        %1269 = vdwg.mxu0
        %v1271 = vsel %vm1089, %v1174, 0
        %1273 = vmatpush.msra.mxu0 0.0
        %1274 = vmatpush.msra.mxu0 0.0
        %1275 = vmatpush.msra.mxu0 0.0
        %1276 = vmatpush.msra.mxu0 0.0
        %1277 = vmatpush.msra.mxu0 0.0
        %1278 = vmatpush.msra.mxu0 0.0
        %1279 = vmatpush.msra.mxu0 0.0
        %1280 = vmatpush.msra.mxu0 0.0
        %1281 = vmatpush.msra.mxu0 0.0
        %1282 = vmatpush.msra.mxu0 0.0
        %1283 = vmatpush.msra.mxu0 0.0
        %1284 = vmatpush.msra.mxu0 0.0
        %1285 = vmatpush.msra.mxu0 0.0
        %1286 = vmatpush.msra.mxu0 0.0
        %1287 = vmatpush.msra.mxu0 0.0
        %1288 = vmatpush.msra.mxu0 %v885
        %1289 = vmatmul.f32.gmra.mxu0 %v1271
        %v1290 = vpop.f32.mrf.mxu0
        %v1291 = vadd.f32 0.0, %v1290
        %1292 = vdwg.mxu0
        %v1294 = vsel %vm1089, %v1175, 0
        %1296 = vmatpush.msra.mxu0 0.0
        %1297 = vmatpush.msra.mxu0 0.0
        %1298 = vmatpush.msra.mxu0 0.0
        %1299 = vmatpush.msra.mxu0 0.0
        %1300 = vmatpush.msra.mxu0 0.0
        %1301 = vmatpush.msra.mxu0 0.0
        %1302 = vmatpush.msra.mxu0 0.0
        %1303 = vmatpush.msra.mxu0 0.0
        %1304 = vmatpush.msra.mxu0 0.0
        %1305 = vmatpush.msra.mxu0 0.0
        %1306 = vmatpush.msra.mxu0 0.0
        %1307 = vmatpush.msra.mxu0 0.0
        %1308 = vmatpush.msra.mxu0 0.0
        %1309 = vmatpush.msra.mxu0 0.0
        %1310 = vmatpush.msra.mxu0 0.0
        %1311 = vmatpush.msra.mxu0 %v888
        %1312 = vmatmul.f32.gmra.mxu0 %v1294
        %v1313 = vpop.f32.mrf.mxu0
        %v1314 = vadd.f32 0.0, %v1313
        %1315 = vdwg.mxu0
        %v1317 = vsel %vm1089, %v1176, 0
        %1319 = vmatpush.msra.mxu0 0.0
        %1320 = vmatpush.msra.mxu0 0.0
        %1321 = vmatpush.msra.mxu0 0.0
        %1322 = vmatpush.msra.mxu0 0.0
        %1323 = vmatpush.msra.mxu0 0.0
        %1324 = vmatpush.msra.mxu0 0.0
        %1325 = vmatpush.msra.mxu0 0.0
        %1326 = vmatpush.msra.mxu0 0.0
        %1327 = vmatpush.msra.mxu0 0.0
        %1328 = vmatpush.msra.mxu0 0.0
        %1329 = vmatpush.msra.mxu0 0.0
        %1330 = vmatpush.msra.mxu0 0.0
        %1331 = vmatpush.msra.mxu0 0.0
        %1332 = vmatpush.msra.mxu0 0.0
        %1333 = vmatpush.msra.mxu0 0.0
        %1334 = vmatpush.msra.mxu0 %v891
        %1335 = vmatmul.f32.gmra.mxu0 %v1317
        %v1336 = vpop.f32.mrf.mxu0
        %v1337 = vadd.f32 0.0, %v1336
        %1338 = vdwg.mxu0
        %v1340 = vsel %vm1089, %v1177, 0
        %1342 = vmatpush.msra.mxu0 0.0
        %1343 = vmatpush.msra.mxu0 0.0
        %1344 = vmatpush.msra.mxu0 0.0
        %1345 = vmatpush.msra.mxu0 0.0
        %1346 = vmatpush.msra.mxu0 0.0
        %1347 = vmatpush.msra.mxu0 0.0
        %1348 = vmatpush.msra.mxu0 0.0
        %1349 = vmatpush.msra.mxu0 0.0
        %1350 = vmatpush.msra.mxu0 0.0
        %1351 = vmatpush.msra.mxu0 0.0
        %1352 = vmatpush.msra.mxu0 0.0
        %1353 = vmatpush.msra.mxu0 0.0
        %1354 = vmatpush.msra.mxu0 0.0
        %1355 = vmatpush.msra.mxu0 0.0
        %1356 = vmatpush.msra.mxu0 0.0
        %1357 = vmatpush.msra.mxu0 %v894
        %1358 = vmatmul.f32.gmra.mxu0 %v1340
        %v1359 = vpop.f32.mrf.mxu0
        %v1360 = vadd.f32 0.0, %v1359
        %1361 = vdwg.mxu0
        %v1362 = vpack.c.bf16 %v1199, %v1199
        %v1363 = vpack.c.bf16 %v1222, %v1222
        %v1364 = vpack.c.bf16 %v1245, %v1245
        %v1365 = vpack.c.bf16 %v1268, %v1268
        %v1366 = vpack.c.bf16 %v1291, %v1291
        %v1367 = vpack.c.bf16 %v1314, %v1314
        %v1368 = vpack.c.bf16 %v1337, %v1337
        %v1369 = vpack.c.bf16 %v1360, %v1360
        %v1370 = vld [vmem:[#allocation10] sm:$0xf]
        %v1371 = vld [vmem:[#allocation10 + $0x4] sm:$0xf]
        %v1372 = vld [vmem:[#allocation10 + $0x8] sm:$0xf]
        %v1373 = vld [vmem:[#allocation10 + $0xc] sm:$0xf]
        %v1374 = vld [vmem:[#allocation10 + $0x10] sm:$0xf]
        %v1375 = vld [vmem:[#allocation10 + $0x14] sm:$0xf]
        %v1376 = vld [vmem:[#allocation10 + $0x18] sm:$0xf]
        %v1377 = vld [vmem:[#allocation10 + $0x1c] sm:$0xf]
        %v1378 = vld [vmem:[#allocation10 + $0x20] sm:$0xf]
        %v1379 = vld [vmem:[#allocation10 + $0x24] sm:$0xf]
        %v1380 = vld [vmem:[#allocation10 + $0x28] sm:$0xf]
        %v1381 = vld [vmem:[#allocation10 + $0x2c] sm:$0xf]
        %v1382 = vld [vmem:[#allocation10 + $0x30] sm:$0xf]
        %v1383 = vld [vmem:[#allocation10 + $0x34] sm:$0xf]
        %v1384 = vld [vmem:[#allocation10 + $0x38] sm:$0xf]
        %v1385 = vld [vmem:[#allocation10 + $0x3c] sm:$0xf]
        %v1388 = vunpack.c.l.b16 %v1370
        %v1389 = vunpack.c.l.b16 %v1371
        %v1390 = vpack.c.b16 %v1389, %v1388
        %v1393 = vsel %vm896, %v1362, 0
        %1395 = vmatpush.bf16.msra.mxu0 0
        %1396 = vmatpush.bf16.msra.mxu0 0
        %1397 = vmatpush.bf16.msra.mxu0 0
        %1398 = vmatpush.bf16.msra.mxu0 0
        %1399 = vmatpush.bf16.msra.mxu0 0
        %1400 = vmatpush.bf16.msra.mxu0 0
        %1401 = vmatpush.bf16.msra.mxu0 0
        %1402 = vmatpush.bf16.msra.mxu0 %v1390
        %1403 = vmatmul.bf16.gmra.mxu0 %v1393
        %v1404 = vpop.f32.mrf.mxu0
        %v1405 = vadd.f32 0.0, %v1404
        %v1406 = vpop.f32.mrf.mxu0
        %1407 = vdwg.mxu0
        %v1410 = vunpack.c.l.b16 %v1372
        %v1411 = vunpack.c.l.b16 %v1373
        %v1412 = vpack.c.b16 %v1411, %v1410
        %v1415 = vsel %vm896, %v1363, 0
        %1417 = vmatpush.bf16.msra.mxu0 0
        %1418 = vmatpush.bf16.msra.mxu0 0
        %1419 = vmatpush.bf16.msra.mxu0 0
        %1420 = vmatpush.bf16.msra.mxu0 0
        %1421 = vmatpush.bf16.msra.mxu0 0
        %1422 = vmatpush.bf16.msra.mxu0 0
        %1423 = vmatpush.bf16.msra.mxu0 0
        %1424 = vmatpush.bf16.msra.mxu0 %v1412
        %1425 = vmatmul.bf16.gmra.mxu0 %v1415
        %v1426 = vpop.f32.mrf.mxu0
        %v1427 = vadd.f32 0.0, %v1426
        %v1428 = vpop.f32.mrf.mxu0
        %1429 = vdwg.mxu0
        %v1432 = vunpack.c.l.b16 %v1374
        %v1433 = vunpack.c.l.b16 %v1375
        %v1434 = vpack.c.b16 %v1433, %v1432
        %v1437 = vsel %vm896, %v1364, 0
        %1439 = vmatpush.bf16.msra.mxu0 0
        %1440 = vmatpush.bf16.msra.mxu0 0
        %1441 = vmatpush.bf16.msra.mxu0 0
        %1442 = vmatpush.bf16.msra.mxu0 0
        %1443 = vmatpush.bf16.msra.mxu0 0
        %1444 = vmatpush.bf16.msra.mxu0 0
        %1445 = vmatpush.bf16.msra.mxu0 0
        %1446 = vmatpush.bf16.msra.mxu0 %v1434
        %1447 = vmatmul.bf16.gmra.mxu0 %v1437
        %v1448 = vpop.f32.mrf.mxu0
        %v1449 = vadd.f32 0.0, %v1448
        %v1450 = vpop.f32.mrf.mxu0
        %1451 = vdwg.mxu0
        %v1454 = vunpack.c.l.b16 %v1376
        %v1455 = vunpack.c.l.b16 %v1377
        %v1456 = vpack.c.b16 %v1455, %v1454
        %v1459 = vsel %vm896, %v1365, 0
        %1461 = vmatpush.bf16.msra.mxu0 0
        %1462 = vmatpush.bf16.msra.mxu0 0
        %1463 = vmatpush.bf16.msra.mxu0 0
        %1464 = vmatpush.bf16.msra.mxu0 0
        %1465 = vmatpush.bf16.msra.mxu0 0
        %1466 = vmatpush.bf16.msra.mxu0 0
        %1467 = vmatpush.bf16.msra.mxu0 0
        %1468 = vmatpush.bf16.msra.mxu0 %v1456
        %1469 = vmatmul.bf16.gmra.mxu0 %v1459
        %v1470 = vpop.f32.mrf.mxu0
        %v1471 = vadd.f32 0.0, %v1470
        %v1472 = vpop.f32.mrf.mxu0
        %1473 = vdwg.mxu0
        %v1476 = vunpack.c.l.b16 %v1378
        %v1477 = vunpack.c.l.b16 %v1379
        %v1478 = vpack.c.b16 %v1477, %v1476
        %v1481 = vsel %vm896, %v1366, 0
        %1483 = vmatpush.bf16.msra.mxu0 0
        %1484 = vmatpush.bf16.msra.mxu0 0
        %1485 = vmatpush.bf16.msra.mxu0 0
        %1486 = vmatpush.bf16.msra.mxu0 0
        %1487 = vmatpush.bf16.msra.mxu0 0
        %1488 = vmatpush.bf16.msra.mxu0 0
        %1489 = vmatpush.bf16.msra.mxu0 0
        %1490 = vmatpush.bf16.msra.mxu0 %v1478
        %1491 = vmatmul.bf16.gmra.mxu0 %v1481
        %v1492 = vpop.f32.mrf.mxu0
        %v1493 = vadd.f32 0.0, %v1492
        %v1494 = vpop.f32.mrf.mxu0
        %1495 = vdwg.mxu0
        %v1498 = vunpack.c.l.b16 %v1380
        %v1499 = vunpack.c.l.b16 %v1381
        %v1500 = vpack.c.b16 %v1499, %v1498
        %v1503 = vsel %vm896, %v1367, 0
        %1505 = vmatpush.bf16.msra.mxu0 0
        %1506 = vmatpush.bf16.msra.mxu0 0
        %1507 = vmatpush.bf16.msra.mxu0 0
        %1508 = vmatpush.bf16.msra.mxu0 0
        %1509 = vmatpush.bf16.msra.mxu0 0
        %1510 = vmatpush.bf16.msra.mxu0 0
        %1511 = vmatpush.bf16.msra.mxu0 0
        %1512 = vmatpush.bf16.msra.mxu0 %v1500
        %1513 = vmatmul.bf16.gmra.mxu0 %v1503
        %v1514 = vpop.f32.mrf.mxu0
        %v1515 = vadd.f32 0.0, %v1514
        %v1516 = vpop.f32.mrf.mxu0
        %1517 = vdwg.mxu0
        %v1520 = vunpack.c.l.b16 %v1382
        %v1521 = vunpack.c.l.b16 %v1383
        %v1522 = vpack.c.b16 %v1521, %v1520
        %v1525 = vsel %vm896, %v1368, 0
        %1527 = vmatpush.bf16.msra.mxu0 0
        %1528 = vmatpush.bf16.msra.mxu0 0
        %1529 = vmatpush.bf16.msra.mxu0 0
        %1530 = vmatpush.bf16.msra.mxu0 0
        %1531 = vmatpush.bf16.msra.mxu0 0
        %1532 = vmatpush.bf16.msra.mxu0 0
        %1533 = vmatpush.bf16.msra.mxu0 0
        %1534 = vmatpush.bf16.msra.mxu0 %v1522
        %1535 = vmatmul.bf16.gmra.mxu0 %v1525
        %v1536 = vpop.f32.mrf.mxu0
        %v1537 = vadd.f32 0.0, %v1536
        %v1538 = vpop.f32.mrf.mxu0
        %1539 = vdwg.mxu0
        %v1542 = vunpack.c.l.b16 %v1384
        %v1543 = vunpack.c.l.b16 %v1385
        %v1544 = vpack.c.b16 %v1543, %v1542
        %v1547 = vsel %vm896, %v1369, 0
        %1549 = vmatpush.bf16.msra.mxu0 0
        %1550 = vmatpush.bf16.msra.mxu0 0
        %1551 = vmatpush.bf16.msra.mxu0 0
        %1552 = vmatpush.bf16.msra.mxu0 0
        %1553 = vmatpush.bf16.msra.mxu0 0
        %1554 = vmatpush.bf16.msra.mxu0 0
        %1555 = vmatpush.bf16.msra.mxu0 0
        %1556 = vmatpush.bf16.msra.mxu0 %v1544
        %1557 = vmatmul.bf16.gmra.mxu0 %v1547
        %v1558 = vpop.f32.mrf.mxu0
        %v1559 = vadd.f32 0.0, %v1558
        %v1560 = vpop.f32.mrf.mxu0
        %1561 = vdwg.mxu0
        %v1562 = vadd.f32 %v1405, %v1427
        %v1563 = vadd.f32 %v1562, %v1449
        %v1564 = vadd.f32 %v1563, %v1471
        %v1565 = vadd.f32 %v1564, %v1493
        %v1566 = vadd.f32 %v1565, %v1515
        %v1567 = vadd.f32 %v1566, %v1537
        %v1568 = vadd.f32 %v1567, %v1559
        %v1569 = vld [vmem:[#allocation11] sm:$0x1]
        %v1571 = vperm.slane %v1569, 0
        %v1573 = vadd.f32 %v1568, %v1571
        %v1574 = vadd.f32 %v598, %v1573
        %1575 = vadd.xlane.f32.xlu0 %v1574
        %v1576 = vpop.xlane.xlu0 %1575
        %v1577 = vmul.f32 %v1576, %v607
        %v1578 = vsub.f32 %v1574, %v1577
        %v1579 = vmul.f32 %v1578, %v1578
        %1580 = vadd.xlane.f32.xlu0 %v1579
        %v1581 = vpop.xlane.xlu0 %1580
        %v1582 = vmul.f32 %v1581, %v607
        %v1583 = vadd.f32 %v1582, 1e-05
        %v1584 = vrsqrt.pop %v1583
        %v1585 = vmul.f32 %v1584, %v1583
        %v1586 = vmul.f32 %v1585, %v1584
        %v1587 = vmul.f32 0.5, %v1586
        %v1588 = vsub.f32 1.5, %v1587
        %v1589 = vmul.f32 %v1584, %v1588
        %vm1590 = vweird.f32 %v1583
        %vm1591 = vweird.f32 %v1584
        %vm1592 = vmor %vm1590, %vm1591
        %v1593 = vsel %vm1592, %v1584, %v1589
        %v1594 = vmul.f32 %v1578, %v1593
        %v1595 = vld [vmem:[#allocation13] sm:$0x1]
        %v1597 = vperm.slane %v1595, 0
        %v1599 = vmul.f32 %v1594, %v1597
        %v1600 = vld [vmem:[#allocation14] sm:$0x1]
        %v1602 = vperm.slane %v1600, 0
        %v1604 = vadd.f32 %v1599, %v1602
        %v1605 = vpack.c.bf16 %v1604, %v1604
        %v1606 = vld [vmem:[#allocation16] sm:$0xff]
        %v1607 = vld [vmem:[#allocation16 + $0x8] sm:$0xff]
        %v1608 = vld [vmem:[#allocation16 + $0x10] sm:$0xff]
        %v1609 = vld [vmem:[#allocation16 + $0x18] sm:$0xff]
        %v1610 = vld [vmem:[#allocation16 + $0x20] sm:$0xff]
        %v1611 = vld [vmem:[#allocation16 + $0x28] sm:$0xff]
        %v1612 = vld [vmem:[#allocation16 + $0x30] sm:$0xff]
        %v1613 = vld [vmem:[#allocation16 + $0x38] sm:$0xff]
        %v1614 = vld [vmem:[#allocation16 + $0x40] sm:$0xff]
        %v1615 = vld [vmem:[#allocation16 + $0x48] sm:$0xff]
        %v1616 = vld [vmem:[#allocation16 + $0x50] sm:$0xff]
        %v1617 = vld [vmem:[#allocation16 + $0x58] sm:$0xff]
        %v1618 = vld [vmem:[#allocation16 + $0x60] sm:$0xff]
        %v1619 = vld [vmem:[#allocation16 + $0x68] sm:$0xff]
        %v1620 = vld [vmem:[#allocation16 + $0x70] sm:$0xff]
        %v1621 = vld [vmem:[#allocation16 + $0x78] sm:$0xff]
        %v1622 = vld [vmem:[#allocation16 + $0x80] sm:$0xff]
        %v1623 = vld [vmem:[#allocation16 + $0x88] sm:$0xff]
        %v1624 = vld [vmem:[#allocation16 + $0x90] sm:$0xff]
        %v1625 = vld [vmem:[#allocation16 + $0x98] sm:$0xff]
        %v1626 = vld [vmem:[#allocation16 + $0xa0] sm:$0xff]
        %v1627 = vld [vmem:[#allocation16 + $0xa8] sm:$0xff]
        %v1628 = vld [vmem:[#allocation16 + $0xb0] sm:$0xff]
        %v1629 = vld [vmem:[#allocation16 + $0xb8] sm:$0xff]
        %v1630 = vld [vmem:[#allocation16 + $0xc0] sm:$0xff]
        %v1631 = vld [vmem:[#allocation16 + $0xc8] sm:$0xff]
        %v1632 = vld [vmem:[#allocation16 + $0xd0] sm:$0xff]
        %v1633 = vld [vmem:[#allocation16 + $0xd8] sm:$0xff]
        %v1634 = vld [vmem:[#allocation16 + $0xe0] sm:$0xff]
        %v1635 = vld [vmem:[#allocation16 + $0xe8] sm:$0xff]
        %v1636 = vld [vmem:[#allocation16 + $0xf0] sm:$0xff]
        %v1637 = vld [vmem:[#allocation16 + $0xf8] sm:$0xff]
        %v1638 = vld [vmem:[%s10] sm:$0xf]
        %v1640 = vperm.slane %v1638, 0
        %v1641 = vperm.slane %v1638, 1
        %v1642 = vperm.slane %v1638, 2
        %v1643 = vperm.slane %v1638, 3
        %v1680 = vunpack.c.l.b16 %v1606
        %v1681 = vunpack.c.h.b16 %v1606
        %v1682 = vunpack.c.l.b16 %v1607
        %v1683 = vunpack.c.h.b16 %v1607
        %v1684 = vunpack.c.l.b16 %v1608
        %v1685 = vunpack.c.h.b16 %v1608
        %v1686 = vunpack.c.l.b16 %v1609
        %v1687 = vunpack.c.h.b16 %v1609
        %v1688 = vunpack.c.l.b16 %v1610
        %v1689 = vunpack.c.h.b16 %v1610
        %v1690 = vunpack.c.l.b16 %v1611
        %v1691 = vunpack.c.h.b16 %v1611
        %v1692 = vunpack.c.l.b16 %v1612
        %v1693 = vunpack.c.h.b16 %v1612
        %v1694 = vunpack.c.l.b16 %v1613
        %v1695 = vunpack.c.h.b16 %v1613
        %v1696 = vunpack.c.l.b16 %v1614
        %v1697 = vunpack.c.h.b16 %v1614
        %v1698 = vunpack.c.l.b16 %v1615
        %v1699 = vunpack.c.h.b16 %v1615
        %v1700 = vunpack.c.l.b16 %v1616
        %v1701 = vunpack.c.h.b16 %v1616
        %v1702 = vunpack.c.l.b16 %v1617
        %v1703 = vunpack.c.h.b16 %v1617
        %v1704 = vunpack.c.l.b16 %v1618
        %v1705 = vunpack.c.h.b16 %v1618
        %v1706 = vunpack.c.l.b16 %v1619
        %v1707 = vunpack.c.h.b16 %v1619
        %v1708 = vunpack.c.l.b16 %v1620
        %v1709 = vunpack.c.h.b16 %v1620
        %v1710 = vunpack.c.l.b16 %v1621
        %v1711 = vunpack.c.h.b16 %v1621
        %v1712 = vunpack.c.l.b16 %v1622
        %v1713 = vunpack.c.h.b16 %v1622
        %v1714 = vunpack.c.l.b16 %v1623
        %v1715 = vunpack.c.h.b16 %v1623
        %v1716 = vunpack.c.l.b16 %v1624
        %v1717 = vunpack.c.h.b16 %v1624
        %v1718 = vunpack.c.l.b16 %v1625
        %v1719 = vunpack.c.h.b16 %v1625
        %v1720 = vunpack.c.l.b16 %v1626
        %v1721 = vunpack.c.h.b16 %v1626
        %v1722 = vunpack.c.l.b16 %v1627
        %v1723 = vunpack.c.h.b16 %v1627
        %v1724 = vunpack.c.l.b16 %v1628
        %v1725 = vunpack.c.h.b16 %v1628
        %v1726 = vunpack.c.l.b16 %v1629
        %v1727 = vunpack.c.h.b16 %v1629
        %v1728 = vunpack.c.l.b16 %v1630
        %v1729 = vunpack.c.h.b16 %v1630
        %v1730 = vunpack.c.l.b16 %v1631
        %v1731 = vunpack.c.h.b16 %v1631
        %v1732 = vunpack.c.l.b16 %v1632
        %v1733 = vunpack.c.h.b16 %v1632
        %v1734 = vunpack.c.l.b16 %v1633
        %v1735 = vunpack.c.h.b16 %v1633
        %v1736 = vunpack.c.l.b16 %v1634
        %v1737 = vunpack.c.h.b16 %v1634
        %v1738 = vunpack.c.l.b16 %v1635
        %v1739 = vunpack.c.h.b16 %v1635
        %v1740 = vunpack.c.l.b16 %v1636
        %v1741 = vunpack.c.h.b16 %v1636
        %v1742 = vunpack.c.l.b16 %v1637
        %v1743 = vunpack.c.h.b16 %v1637
        %v1744 = vpack.c.b16 %v1684, %v1680
        %v1745 = vpack.c.b16 %v1685, %v1681
        %v1746 = vpack.c.b16 %v1686, %v1682
        %v1747 = vpack.c.b16 %v1687, %v1683
        %v1748 = vpack.c.b16 %v1692, %v1688
        %v1749 = vpack.c.b16 %v1693, %v1689
        %v1750 = vpack.c.b16 %v1694, %v1690
        %v1751 = vpack.c.b16 %v1695, %v1691
        %v1752 = vpack.c.b16 %v1700, %v1696
        %v1753 = vpack.c.b16 %v1701, %v1697
        %v1754 = vpack.c.b16 %v1702, %v1698
        %v1755 = vpack.c.b16 %v1703, %v1699
        %v1756 = vpack.c.b16 %v1708, %v1704
        %v1757 = vpack.c.b16 %v1709, %v1705
        %v1758 = vpack.c.b16 %v1710, %v1706
        %v1759 = vpack.c.b16 %v1711, %v1707
        %v1760 = vpack.c.b16 %v1716, %v1712
        %v1761 = vpack.c.b16 %v1717, %v1713
        %v1762 = vpack.c.b16 %v1718, %v1714
        %v1763 = vpack.c.b16 %v1719, %v1715
        %v1764 = vpack.c.b16 %v1724, %v1720
        %v1765 = vpack.c.b16 %v1725, %v1721
        %v1766 = vpack.c.b16 %v1726, %v1722
        %v1767 = vpack.c.b16 %v1727, %v1723
        %v1768 = vpack.c.b16 %v1732, %v1728
        %v1769 = vpack.c.b16 %v1733, %v1729
        %v1770 = vpack.c.b16 %v1734, %v1730
        %v1771 = vpack.c.b16 %v1735, %v1731
        %v1772 = vpack.c.b16 %v1740, %v1736
        %v1773 = vpack.c.b16 %v1741, %v1737
        %v1774 = vpack.c.b16 %v1742, %v1738
        %v1775 = vpack.c.b16 %v1743, %v1739
        %1808 = vmatpush.bf16.msra.mxu0 %v1772
        %1809 = vmatpush.bf16.msra.mxu0 %v1768
        %1810 = vmatpush.bf16.msra.mxu0 %v1764
        %1811 = vmatpush.bf16.msra.mxu0 %v1760
        %1812 = vmatpush.bf16.msra.mxu0 %v1756
        %1813 = vmatpush.bf16.msra.mxu0 %v1752
        %1814 = vmatpush.bf16.msra.mxu0 %v1748
        %1815 = vmatpush.bf16.msra.mxu0 %v1744
        %1816 = vmatmul.bf16.gmra.mxu0 %v1605
        %v1817 = vpop.f32.mrf.mxu0
        %v1818 = vadd.f32 %v1640, %v1817
        %v1819 = vpop.f32.mrf.mxu0
        %1820 = vdwg.mxu0
        %1821 = vmatpush.bf16.msra.mxu0 %v1773
        %1822 = vmatpush.bf16.msra.mxu0 %v1769
        %1823 = vmatpush.bf16.msra.mxu0 %v1765
        %1824 = vmatpush.bf16.msra.mxu0 %v1761
        %1825 = vmatpush.bf16.msra.mxu0 %v1757
        %1826 = vmatpush.bf16.msra.mxu0 %v1753
        %1827 = vmatpush.bf16.msra.mxu0 %v1749
        %1828 = vmatpush.bf16.msra.mxu0 %v1745
        %1829 = vmatmul.bf16.gmra.mxu0 %v1605
        %v1830 = vpop.f32.mrf.mxu0
        %v1831 = vadd.f32 %v1641, %v1830
        %v1832 = vpop.f32.mrf.mxu0
        %1833 = vdwg.mxu0
        %1834 = vmatpush.bf16.msra.mxu0 %v1774
        %1835 = vmatpush.bf16.msra.mxu0 %v1770
        %1836 = vmatpush.bf16.msra.mxu0 %v1766
        %1837 = vmatpush.bf16.msra.mxu0 %v1762
        %1838 = vmatpush.bf16.msra.mxu0 %v1758
        %1839 = vmatpush.bf16.msra.mxu0 %v1754
        %1840 = vmatpush.bf16.msra.mxu0 %v1750
        %1841 = vmatpush.bf16.msra.mxu0 %v1746
        %1842 = vmatmul.bf16.gmra.mxu0 %v1605
        %v1843 = vpop.f32.mrf.mxu0
        %v1844 = vadd.f32 %v1642, %v1843
        %v1845 = vpop.f32.mrf.mxu0
        %1846 = vdwg.mxu0
        %1847 = vmatpush.bf16.msra.mxu0 %v1775
        %1848 = vmatpush.bf16.msra.mxu0 %v1771
        %1849 = vmatpush.bf16.msra.mxu0 %v1767
        %1850 = vmatpush.bf16.msra.mxu0 %v1763
        %1851 = vmatpush.bf16.msra.mxu0 %v1759
        %1852 = vmatpush.bf16.msra.mxu0 %v1755
        %1853 = vmatpush.bf16.msra.mxu0 %v1751
        %1854 = vmatpush.bf16.msra.mxu0 %v1747
        %1855 = vmatmul.bf16.gmra.mxu0 %v1605
        %v1856 = vpop.f32.mrf.mxu0
        %v1857 = vadd.f32 %v1643, %v1856
        %v1858 = vpop.f32.mrf.mxu0
        %1859 = vdwg.mxu0
        %v1860 = vmax.f32 %v1818, 0.0
        %v1861 = vmax.f32 %v1831, 0.0
        %v1862 = vmax.f32 %v1844, 0.0
        %v1863 = vmax.f32 %v1857, 0.0
        %v1864 = vpack.c.bf16 %v1860, %v1860
        %v1865 = vpack.c.bf16 %v1861, %v1861
        %v1866 = vpack.c.bf16 %v1862, %v1862
        %v1867 = vpack.c.bf16 %v1863, %v1863
        %v1868 = vld [vmem:[#allocation17] sm:$0xf]
        %v1869 = vld [vmem:[#allocation17 + $0x4] sm:$0xf]
        %v1870 = vld [vmem:[#allocation17 + $0x8] sm:$0xf]
        %v1871 = vld [vmem:[#allocation17 + $0xc] sm:$0xf]
        %v1872 = vld [vmem:[#allocation17 + $0x10] sm:$0xf]
        %v1873 = vld [vmem:[#allocation17 + $0x14] sm:$0xf]
        %v1874 = vld [vmem:[#allocation17 + $0x18] sm:$0xf]
        %v1875 = vld [vmem:[#allocation17 + $0x1c] sm:$0xf]
        %v1876 = vld [vmem:[#allocation17 + $0x20] sm:$0xf]
        %v1877 = vld [vmem:[#allocation17 + $0x24] sm:$0xf]
        %v1878 = vld [vmem:[#allocation17 + $0x28] sm:$0xf]
        %v1879 = vld [vmem:[#allocation17 + $0x2c] sm:$0xf]
        %v1880 = vld [vmem:[#allocation17 + $0x30] sm:$0xf]
        %v1881 = vld [vmem:[#allocation17 + $0x34] sm:$0xf]
        %v1882 = vld [vmem:[#allocation17 + $0x38] sm:$0xf]
        %v1883 = vld [vmem:[#allocation17 + $0x3c] sm:$0xf]
        %v1884 = vld [vmem:[#allocation17 + $0x40] sm:$0xf]
        %v1885 = vld [vmem:[#allocation17 + $0x44] sm:$0xf]
        %v1886 = vld [vmem:[#allocation17 + $0x48] sm:$0xf]
        %v1887 = vld [vmem:[#allocation17 + $0x4c] sm:$0xf]
        %v1888 = vld [vmem:[#allocation17 + $0x50] sm:$0xf]
        %v1889 = vld [vmem:[#allocation17 + $0x54] sm:$0xf]
        %v1890 = vld [vmem:[#allocation17 + $0x58] sm:$0xf]
        %v1891 = vld [vmem:[#allocation17 + $0x5c] sm:$0xf]
        %v1892 = vld [vmem:[#allocation17 + $0x60] sm:$0xf]
        %v1893 = vld [vmem:[#allocation17 + $0x64] sm:$0xf]
        %v1894 = vld [vmem:[#allocation17 + $0x68] sm:$0xf]
        %v1895 = vld [vmem:[#allocation17 + $0x6c] sm:$0xf]
        %v1896 = vld [vmem:[#allocation17 + $0x70] sm:$0xf]
        %v1897 = vld [vmem:[#allocation17 + $0x74] sm:$0xf]
        %v1898 = vld [vmem:[#allocation17 + $0x78] sm:$0xf]
        %v1899 = vld [vmem:[#allocation17 + $0x7c] sm:$0xf]
        %v1900 = vld [vmem:[#allocation17 + $0x80] sm:$0xf]
        %v1901 = vld [vmem:[#allocation17 + $0x84] sm:$0xf]
        %v1902 = vld [vmem:[#allocation17 + $0x88] sm:$0xf]
        %v1903 = vld [vmem:[#allocation17 + $0x8c] sm:$0xf]
        %v1904 = vld [vmem:[#allocation17 + $0x90] sm:$0xf]
        %v1905 = vld [vmem:[#allocation17 + $0x94] sm:$0xf]
        %v1906 = vld [vmem:[#allocation17 + $0x98] sm:$0xf]
        %v1907 = vld [vmem:[#allocation17 + $0x9c] sm:$0xf]
        %v1908 = vld [vmem:[#allocation17 + $0xa0] sm:$0xf]
        %v1909 = vld [vmem:[#allocation17 + $0xa4] sm:$0xf]
        %v1910 = vld [vmem:[#allocation17 + $0xa8] sm:$0xf]
        %v1911 = vld [vmem:[#allocation17 + $0xac] sm:$0xf]
        %v1912 = vld [vmem:[#allocation17 + $0xb0] sm:$0xf]
        %v1913 = vld [vmem:[#allocation17 + $0xb4] sm:$0xf]
        %v1914 = vld [vmem:[#allocation17 + $0xb8] sm:$0xf]
        %v1915 = vld [vmem:[#allocation17 + $0xbc] sm:$0xf]
        %v1916 = vld [vmem:[#allocation17 + $0xc0] sm:$0xf]
        %v1917 = vld [vmem:[#allocation17 + $0xc4] sm:$0xf]
        %v1918 = vld [vmem:[#allocation17 + $0xc8] sm:$0xf]
        %v1919 = vld [vmem:[#allocation17 + $0xcc] sm:$0xf]
        %v1920 = vld [vmem:[#allocation17 + $0xd0] sm:$0xf]
        %v1921 = vld [vmem:[#allocation17 + $0xd4] sm:$0xf]
        %v1922 = vld [vmem:[#allocation17 + $0xd8] sm:$0xf]
        %v1923 = vld [vmem:[#allocation17 + $0xdc] sm:$0xf]
        %v1924 = vld [vmem:[#allocation17 + $0xe0] sm:$0xf]
        %v1925 = vld [vmem:[#allocation17 + $0xe4] sm:$0xf]
        %v1926 = vld [vmem:[#allocation17 + $0xe8] sm:$0xf]
        %v1927 = vld [vmem:[#allocation17 + $0xec] sm:$0xf]
        %v1928 = vld [vmem:[#allocation17 + $0xf0] sm:$0xf]
        %v1929 = vld [vmem:[#allocation17 + $0xf4] sm:$0xf]
        %v1930 = vld [vmem:[#allocation17 + $0xf8] sm:$0xf]
        %v1931 = vld [vmem:[#allocation17 + $0xfc] sm:$0xf]
        %v1932 = vld [vmem:[%s12] sm:$0x1]
        %v1934 = vperm.slane %v1932, 0
        %v2000 = vunpack.c.l.b16 %v1868
        %v2001 = vunpack.c.l.b16 %v1869
        %v2002 = vunpack.c.l.b16 %v1870
        %v2003 = vunpack.c.l.b16 %v1871
        %v2004 = vunpack.c.l.b16 %v1872
        %v2005 = vunpack.c.l.b16 %v1873
        %v2006 = vunpack.c.l.b16 %v1874
        %v2007 = vunpack.c.l.b16 %v1875
        %v2008 = vunpack.c.l.b16 %v1876
        %v2009 = vunpack.c.l.b16 %v1877
        %v2010 = vunpack.c.l.b16 %v1878
        %v2011 = vunpack.c.l.b16 %v1879
        %v2012 = vunpack.c.l.b16 %v1880
        %v2013 = vunpack.c.l.b16 %v1881
        %v2014 = vunpack.c.l.b16 %v1882
        %v2015 = vunpack.c.l.b16 %v1883
        %v2016 = vunpack.c.l.b16 %v1884
        %v2017 = vunpack.c.l.b16 %v1885
        %v2018 = vunpack.c.l.b16 %v1886
        %v2019 = vunpack.c.l.b16 %v1887
        %v2020 = vunpack.c.l.b16 %v1888
        %v2021 = vunpack.c.l.b16 %v1889
        %v2022 = vunpack.c.l.b16 %v1890
        %v2023 = vunpack.c.l.b16 %v1891
        %v2024 = vunpack.c.l.b16 %v1892
        %v2025 = vunpack.c.l.b16 %v1893
        %v2026 = vunpack.c.l.b16 %v1894
        %v2027 = vunpack.c.l.b16 %v1895
        %v2028 = vunpack.c.l.b16 %v1896
        %v2029 = vunpack.c.l.b16 %v1897
        %v2030 = vunpack.c.l.b16 %v1898
        %v2031 = vunpack.c.l.b16 %v1899
        %v2032 = vunpack.c.l.b16 %v1900
        %v2033 = vunpack.c.l.b16 %v1901
        %v2034 = vunpack.c.l.b16 %v1902
        %v2035 = vunpack.c.l.b16 %v1903
        %v2036 = vunpack.c.l.b16 %v1904
        %v2037 = vunpack.c.l.b16 %v1905
        %v2038 = vunpack.c.l.b16 %v1906
        %v2039 = vunpack.c.l.b16 %v1907
        %v2040 = vunpack.c.l.b16 %v1908
        %v2041 = vunpack.c.l.b16 %v1909
        %v2042 = vunpack.c.l.b16 %v1910
        %v2043 = vunpack.c.l.b16 %v1911
        %v2044 = vunpack.c.l.b16 %v1912
        %v2045 = vunpack.c.l.b16 %v1913
        %v2046 = vunpack.c.l.b16 %v1914
        %v2047 = vunpack.c.l.b16 %v1915
        %v2048 = vunpack.c.l.b16 %v1916
        %v2049 = vunpack.c.l.b16 %v1917
        %v2050 = vunpack.c.l.b16 %v1918
        %v2051 = vunpack.c.l.b16 %v1919
        %v2052 = vunpack.c.l.b16 %v1920
        %v2053 = vunpack.c.l.b16 %v1921
        %v2054 = vunpack.c.l.b16 %v1922
        %v2055 = vunpack.c.l.b16 %v1923
        %v2056 = vunpack.c.l.b16 %v1924
        %v2057 = vunpack.c.l.b16 %v1925
        %v2058 = vunpack.c.l.b16 %v1926
        %v2059 = vunpack.c.l.b16 %v1927
        %v2060 = vunpack.c.l.b16 %v1928
        %v2061 = vunpack.c.l.b16 %v1929
        %v2062 = vunpack.c.l.b16 %v1930
        %v2063 = vunpack.c.l.b16 %v1931
        %v2064 = vpack.c.b16 %v2001, %v2000
        %v2065 = vpack.c.b16 %v2003, %v2002
        %v2066 = vpack.c.b16 %v2005, %v2004
        %v2067 = vpack.c.b16 %v2007, %v2006
        %v2068 = vpack.c.b16 %v2009, %v2008
        %v2069 = vpack.c.b16 %v2011, %v2010
        %v2070 = vpack.c.b16 %v2013, %v2012
        %v2071 = vpack.c.b16 %v2015, %v2014
        %v2072 = vpack.c.b16 %v2017, %v2016
        %v2073 = vpack.c.b16 %v2019, %v2018
        %v2074 = vpack.c.b16 %v2021, %v2020
        %v2075 = vpack.c.b16 %v2023, %v2022
        %v2076 = vpack.c.b16 %v2025, %v2024
        %v2077 = vpack.c.b16 %v2027, %v2026
        %v2078 = vpack.c.b16 %v2029, %v2028
        %v2079 = vpack.c.b16 %v2031, %v2030
        %v2080 = vpack.c.b16 %v2033, %v2032
        %v2081 = vpack.c.b16 %v2035, %v2034
        %v2082 = vpack.c.b16 %v2037, %v2036
        %v2083 = vpack.c.b16 %v2039, %v2038
        %v2084 = vpack.c.b16 %v2041, %v2040
        %v2085 = vpack.c.b16 %v2043, %v2042
        %v2086 = vpack.c.b16 %v2045, %v2044
        %v2087 = vpack.c.b16 %v2047, %v2046
        %v2088 = vpack.c.b16 %v2049, %v2048
        %v2089 = vpack.c.b16 %v2051, %v2050
        %v2090 = vpack.c.b16 %v2053, %v2052
        %v2091 = vpack.c.b16 %v2055, %v2054
        %v2092 = vpack.c.b16 %v2057, %v2056
        %v2093 = vpack.c.b16 %v2059, %v2058
        %v2094 = vpack.c.b16 %v2061, %v2060
        %v2095 = vpack.c.b16 %v2063, %v2062
        %2128 = vmatpush.bf16.msra.mxu0 %v2071
        %2129 = vmatpush.bf16.msra.mxu0 %v2070
        %2130 = vmatpush.bf16.msra.mxu0 %v2069
        %2131 = vmatpush.bf16.msra.mxu0 %v2068
        %2132 = vmatpush.bf16.msra.mxu0 %v2067
        %2133 = vmatpush.bf16.msra.mxu0 %v2066
        %2134 = vmatpush.bf16.msra.mxu0 %v2065
        %2135 = vmatpush.bf16.msra.mxu0 %v2064
        %2136 = vmatmul.bf16.gmra.mxu0 %v1864
        %v2137 = vpop.f32.mrf.mxu0
        %v2138 = vadd.f32 %v1934, %v2137
        %v2139 = vpop.f32.mrf.mxu0
        %2140 = vdwg.mxu0
        %2141 = vmatpush.bf16.msra.mxu0 %v2079
        %2142 = vmatpush.bf16.msra.mxu0 %v2078
        %2143 = vmatpush.bf16.msra.mxu0 %v2077
        %2144 = vmatpush.bf16.msra.mxu0 %v2076
        %2145 = vmatpush.bf16.msra.mxu0 %v2075
        %2146 = vmatpush.bf16.msra.mxu0 %v2074
        %2147 = vmatpush.bf16.msra.mxu0 %v2073
        %2148 = vmatpush.bf16.msra.mxu0 %v2072
        %2149 = vmatmul.bf16.gmra.mxu0 %v1865
        %v2150 = vpop.f32.mrf.mxu0
        %v2151 = vadd.f32 %v2138, %v2150
        %v2152 = vpop.f32.mrf.mxu0
        %2153 = vdwg.mxu0
        %2154 = vmatpush.bf16.msra.mxu0 %v2087
        %2155 = vmatpush.bf16.msra.mxu0 %v2086
        %2156 = vmatpush.bf16.msra.mxu0 %v2085
        %2157 = vmatpush.bf16.msra.mxu0 %v2084
        %2158 = vmatpush.bf16.msra.mxu0 %v2083
        %2159 = vmatpush.bf16.msra.mxu0 %v2082
        %2160 = vmatpush.bf16.msra.mxu0 %v2081
        %2161 = vmatpush.bf16.msra.mxu0 %v2080
        %2162 = vmatmul.bf16.gmra.mxu0 %v1866
        %v2163 = vpop.f32.mrf.mxu0
        %v2164 = vadd.f32 %v2151, %v2163
        %v2165 = vpop.f32.mrf.mxu0
        %2166 = vdwg.mxu0
        %2167 = vmatpush.bf16.msra.mxu0 %v2095
        %2168 = vmatpush.bf16.msra.mxu0 %v2094
        %2169 = vmatpush.bf16.msra.mxu0 %v2093
        %2170 = vmatpush.bf16.msra.mxu0 %v2092
        %2171 = vmatpush.bf16.msra.mxu0 %v2091
        %2172 = vmatpush.bf16.msra.mxu0 %v2090
        %2173 = vmatpush.bf16.msra.mxu0 %v2089
        %2174 = vmatpush.bf16.msra.mxu0 %v2088
        %2175 = vmatmul.bf16.gmra.mxu0 %v1867
        %v2176 = vpop.f32.mrf.mxu0
        %v2177 = vadd.f32 %v2164, %v2176
        %v2178 = vpop.f32.mrf.mxu0
        %2179 = vdwg.mxu0
        %v2180 = vadd.f32 %v1574, %v2177
        %2181 = vst [vmem:[%s596] sm:$0xff] %v2180
        %s2182 = sand.u32 %s321, 1
        %s2183 = scalar_lea.sflag [#allocation4], %s2182
        %s2184 = sand.u32 %s321, 1
        %s2185 = smul.addr %s2184, 8
        %s2186 = scalar_lea.vmem [#allocation19], %s2185
        // Predicated region
        $region113: #{tpu_custom_call.1} parent=71 // pred_check
          %p2187 = pneg %p331
        $region114: #{tpu_custom_call.1} parent=71 // pred_check_branch
          %2189 = sbr.rel (%p2187) target = $region116
        $region115: #{tpu_custom_call.1} parent=71 // pred_region
          %2191 = vsyncadd %s2183, 0
          %s2192 = smul.addr %s35, 8
          %s2193 = scalar_lea.hbm %s13, %s2192
          %s2195 = sshll.u32 %s2186, 4
          %s2196 = int_to_ptr.vmem [resolvable:$true] %s2195
          %s2197 = sshll.u32 %s2193, 4
          %s2198 = int_to_ptr.hbm [resolvable:$true] %s2197
          %2200 = dma.vmem_to_hbm [thread:$0]  %s2196, 128, %s2198, %s2183
        $region116: #{tpu_custom_call.1} parent=71 // pred_fallthru
          _
      $region72: #{tpu_custom_call.1} parent=5 // pred_fallthru
        _
      %p2201 = scmp.le.s32.totalorder 2, %s30
      // Predicated region
      $region117: #{tpu_custom_call.1} parent=5 // pred_check
        %p2202 = pneg %p2201
      $region118: #{tpu_custom_call.1} parent=5 // pred_check_branch
        %2204 = sbr.rel (%p2202) target = $region120
      $region119: #{tpu_custom_call.1} parent=5 // pred_region
        %s2205 = ssub.s32 %s30, 2
        // Predicated region
        $region121: #{tpu_custom_call.1} parent=119 // pred_check
          %p2206 = pneg %p337
        $region122: #{tpu_custom_call.1} parent=119 // pred_check_branch
          %2208 = sbr.rel (%p2206) target = $region124
        $region123: #{tpu_custom_call.1} parent=119 // pred_region
          %s2209 = sand.u32 %s322, 1
          %s2210 = scalar_lea.sflag [#allocation4], %s2209
          %s2211 = sand.u32 %s322, 1
          %s2212 = smul.addr %s2211, 8
          %s2213 = scalar_lea.vmem [#allocation19], %s2212
          %2215 = dma.done %s2210, 128
        $region124: #{tpu_custom_call.1} parent=119 // pred_fallthru
          _
      $region120: #{tpu_custom_call.1} parent=5 // pred_fallthru
        _
    $region6: #{tpu_custom_call.1} parent=1 // loop_footer
      %s34 = sadd.s32 1, %s30
    $region7: #{tpu_custom_call.1} parent=1 // loop_footer_branch
      %29 = sbr.rel target = $region3
    $region8: #{tpu_custom_call.1} parent=1 // loop_exit
      _
    %2216 = vsyncpa [#allocation3], 1
    %s2217 = scalar_lea.sflag [#allocation3], 1
    %2218 = vsyncpa %s2217, 1
    %2219 = vsyncpa [#allocation6], 1
    %2220 = vsyncpa [#allocation9], 1
    %2221 = vsyncpa [#allocation12], 1
    %2222 = vsyncpa [#allocation15], 1
    %2223 = vsyncpa [#allocation18], 1
    %2224 = vsyncpa [#allocation4], 1
    %s2225 = scalar_lea.sflag [#allocation4], 1
    %2226 = vsyncpa %s2225, 1

</llo_original>
